<compile_context>
chip_gen: v6e
topology: v6e:2x2x1
jax: 0.10.0
libtpu: 0.0.40
codegen_flags: <defaults>
</compile_context>

<pallas_src>
import functools

import jax
import jax.numpy as jnp
from jax.experimental import pallas as pl
from jax.experimental.pallas import tpu as pltpu


def _layer_norm(z, gamma, beta, eps=1e-5):
    mean = jnp.mean(z, axis=-1, keepdims=True)
    var = jnp.mean((z - mean) ** 2, axis=-1, keepdims=True)
    return (z - mean) * jax.lax.rsqrt(var + eps) * gamma + beta


def encoder_block_kernel(x_ref, wqkv_t_ref, bqkv_ref, wo_t_ref, bo_ref,
                         g1_ref, be1_ref, w1_t_ref, bf1_ref, w2_t_ref, bf2_ref,
                         g2_ref, be2_ref, o_ref, *, num_heads):
    BN, K, E = x_ref.shape
    hd = E // num_heads
    scale = 1.0 / (hd ** 0.5)

    # Tall LHS: every token of this block at once (leading-dim merge is cheap).
    x2 = x_ref[...].reshape(BN * K, E)                                  # (BN*K, E)

    # Fused Q/K/V projection: one MXU push against the pre-transposed (E, 3E)
    # weight, f32 accumulation, bias added once.
    qkv = jnp.dot(x2, wqkv_t_ref[...],
                  preferred_element_type=jnp.float32) + bqkv_ref[...]   # (BN*K, 3E)
    q = qkv[:, 0 * E:1 * E].reshape(BN, K, E)
    k = qkv[:, 1 * E:2 * E].reshape(BN, K, E)
    v = qkv[:, 2 * E:3 * E].reshape(BN, K, E)

    # Multi-head attention.  No lane-axis concatenate: fold each head's context
    # straight into the output projection (mathematically identical).
    # TODO(synk): for large K, switch to a flash-style K-blocked online softmax
    # to avoid materializing the (BN, K, K) scores (VMEM on v7x).
    wo_t = wo_t_ref[...]                                                # (E, E)
    out1 = jnp.zeros((BN * K, E), jnp.float32)
    for h in range(num_heads):                                          # static, tiny
        sl = slice(h * hd, (h + 1) * hd)
        qh, kh, vh = q[..., sl], k[..., sl], v[..., sl]                 # (BN, K, hd)
        s = jnp.einsum('bqd,bkd->bqk', qh, kh,
                       preferred_element_type=jnp.float32) * scale      # (BN, K, K)
        s = s - jnp.max(s, axis=-1, keepdims=True)
        p = jnp.exp(s)
        p = p * pl.reciprocal(jnp.sum(p, axis=-1, keepdims=True), approx=True)
        ctx = jnp.einsum('bqk,bkd->bqd', p.astype(vh.dtype), vh,
                         preferred_element_type=jnp.float32)            # (BN, K, hd)
        out1 = out1 + jnp.dot(ctx.reshape(BN * K, hd), wo_t[sl, :],
                              preferred_element_type=jnp.float32)
    out1 = out1 + bo_ref[...]

    # dropout -> identity (eval mode); residual + LayerNorm 1 (f32 math).
    out2 = _layer_norm(out1 + x2.astype(jnp.float32), g1_ref[...], be1_ref[...])

    # FeedForward: Linear(E->F) -> ReLU -> Linear(F->E), pre-transposed weights.
    h1 = jnp.maximum(
        jnp.dot(out2, w1_t_ref[...], preferred_element_type=jnp.float32)
        + bf1_ref[...], 0.0)
    out3 = jnp.dot(h1, w2_t_ref[...],
                   preferred_element_type=jnp.float32) + bf2_ref[...]

    # dropout -> identity; residual + LayerNorm 2.
    y = _layer_norm(out3 + out2, g2_ref[...], be2_ref[...])

    o_ref[...] = y.reshape(BN, K, E).astype(o_ref.dtype)


def encoder_block(x, params, num_heads, block_n=None):
    N, K, E = x.shape
    assert E % num_heads == 0
    wqkv, bqkv, wo, bo, g1, be1, w1, bf1, w2, bf2, g2, be2 = params

    # Pre-transpose all weights once on the wrapper side (no in-kernel .T).
    kparams = (wqkv.T, bqkv, wo.T, bo, g1, be1, w1.T, bf1, w2.T, bf2, g2, be2)

    # Whole batch per grid step by default (single-TC v5e/v6e: minimizes
    # per-step overhead).  On v7x pass block_n = pl.cdiv(N, 2) so both
    # TensorCores get a "parallel" grid step.
    if block_n is None:
        block_n = N
    assert N % block_n == 0
    grid = (N // block_n,)

    def full_spec(arr):
        nd = arr.ndim
        return pl.BlockSpec(arr.shape, lambda b, _nd=nd: (0,) * _nd)

    kernel = functools.partial(encoder_block_kernel, num_heads=num_heads)
    return pl.pallas_call(
        kernel,
        out_shape=jax.ShapeDtypeStruct((N, K, E), x.dtype),
        grid_spec=pltpu.PrefetchScalarGridSpec(
            num_scalar_prefetch=0,
            grid=grid,
            in_specs=[pl.BlockSpec((block_n, K, E), lambda b: (b, 0, 0))]
                     + [full_spec(p) for p in kparams],
            out_specs=pl.BlockSpec((block_n, K, E), lambda b: (b, 0, 0)),
        ),
        compiler_params=pltpu.CompilerParams(
            dimension_semantics=("parallel",)),
    )(x, *kparams)


def reference(x, params, num_heads):
    """Pure-JAX reference matching PyTorch nn.MultiheadAttention + FFN + LayerNorms."""
    wqkv, bqkv, wo, bo, g1, be1, w1, bf1, w2, bf2, g2, be2 = params
    N, K, E = x.shape
    hd = E // num_heads
    qkv = jnp.einsum('nke,fe->nkf', x, wqkv) + bqkv[0]
    q, k, v = qkv[..., :E], qkv[..., E:2 * E], qkv[..., 2 * E:]
    q = q.reshape(N, K, num_heads, hd)
    k = k.reshape(N, K, num_heads, hd)
    v = v.reshape(N, K, num_heads, hd)
    s = jnp.einsum('nqhd,nkhd->nhqk', q, k) / jnp.sqrt(jnp.float32(hd))
    p = jax.nn.softmax(s, axis=-1)
    o = jnp.einsum('nhqk,nkhd->nqhd', p, v).reshape(N, K, E)
    out1 = o @ wo.T + bo[0]

    def ln(z, g, b):
        m = z.mean(-1, keepdims=True)
        vv = ((z - m) ** 2).mean(-1, keepdims=True)
        return (z - m) / jnp.sqrt(vv + 1e-5) * g[0] + b[0]

    out2 = ln(out1 + x, g1, be1)
    h1 = jax.nn.relu(out2 @ w1.T + bf1[0])
    out3 = h1 @ w2.T + bf2[0]
    return ln(out3 + out2, g2, be2)


if __name__ == "__main__":
    N, K, E = 2, 8, 32          # batch, seq, embed_dim
    NUM_HEADS = 4
    F = 64                      # feedforward_dim

    key = jax.random.PRNGKey(0)
    keys = jax.random.split(key, 8)

    x = jax.random.normal(keys[0], (N, K, E), jnp.float32)

    # Deterministic parameter init (shapes match nn.MultiheadAttention / FFN / LayerNorm).
    wqkv = 0.1 * jax.random.normal(keys[1], (3 * E, E), jnp.float32)   # in_proj_weight
    bqkv = 0.1 * jax.random.normal(keys[2], (1, 3 * E), jnp.float32)   # in_proj_bias
    wo = 0.1 * jax.random.normal(keys[3], (E, E), jnp.float32)         # out_proj.weight
    bo = 0.1 * jax.random.normal(keys[4], (1, E), jnp.float32)         # out_proj.bias
    g1 = jnp.ones((1, E), jnp.float32)                                 # norm1.weight
    be1 = jnp.zeros((1, E), jnp.float32)                               # norm1.bias
    w1 = 0.1 * jax.random.normal(keys[5], (F, E), jnp.float32)         # FFN linear1.weight
    bf1 = 0.1 * jax.random.normal(keys[6], (1, F), jnp.float32)        # FFN linear1.bias
    w2 = 0.1 * jax.random.normal(keys[7], (E, F), jnp.float32)         # FFN linear2.weight
    bf2 = jnp.zeros((1, E), jnp.float32)                               # FFN linear2.bias
    g2 = jnp.ones((1, E), jnp.float32)                                 # norm2.weight
    be2 = jnp.zeros((1, E), jnp.float32)                               # norm2.bias

    params = (wqkv, bqkv, wo, bo, g1, be1, w1, bf1, w2, bf2, g2, be2)

    y = encoder_block(x, params, NUM_HEADS)
    y = jax.block_until_ready(y)

    y_ref = jax.block_until_ready(reference(x, params, NUM_HEADS))
    assert y.shape == (N, K, E)
    assert jnp.allclose(y, y_ref, atol=1e-2, rtol=1e-2), "mismatch vs pure-JAX reference"

    print("KERNEL_OK")
</pallas_src>

<mosaic_0001>
module attributes {stable_mosaic.version = 11 : i64} {
  func.func @encoder_block_kernel(%arg0: i32, %arg1: memref<2x8x32xf32, #tpu.memory_space<vmem>>, %arg2: memref<32x96xf32, #tpu.memory_space<vmem>>, %arg3: memref<1x96xf32, #tpu.memory_space<vmem>>, %arg4: memref<32x32xf32, #tpu.memory_space<vmem>>, %arg5: memref<1x32xf32, #tpu.memory_space<vmem>>, %arg6: memref<1x32xf32, #tpu.memory_space<vmem>>, %arg7: memref<1x32xf32, #tpu.memory_space<vmem>>, %arg8: memref<32x64xf32, #tpu.memory_space<vmem>>, %arg9: memref<1x64xf32, #tpu.memory_space<vmem>>, %arg10: memref<64x32xf32, #tpu.memory_space<vmem>>, %arg11: memref<1x32xf32, #tpu.memory_space<vmem>>, %arg12: memref<1x32xf32, #tpu.memory_space<vmem>>, %arg13: memref<1x32xf32, #tpu.memory_space<vmem>>, %arg14: memref<2x8x32xf32, #tpu.memory_space<vmem>>) attributes {dimension_semantics = [#tpu.dimension_semantics<parallel>], iteration_bounds = array<i64: 1>, scalar_prefetch = 0 : i64, scratch_operands = 0 : i64, tpu.core_type = #tpu.core_type<tc>, window_params = [{transform_indices = @transform_0, window_bounds = array<i64: 2, 8, 32>}, {pipeline_mode = #tpu.pipeline_mode<synchronous>, transform_indices = @transform_1, window_bounds = array<i64: 32, 96>}, {pipeline_mode = #tpu.pipeline_mode<synchronous>, transform_indices = @transform_2, window_bounds = array<i64: 1, 96>}, {pipeline_mode = #tpu.pipeline_mode<synchronous>, transform_indices = @transform_3, window_bounds = array<i64: 32, 32>}, {pipeline_mode = #tpu.pipeline_mode<synchronous>, transform_indices = @transform_4, window_bounds = array<i64: 1, 32>}, {pipeline_mode = #tpu.pipeline_mode<synchronous>, transform_indices = @transform_5, window_bounds = array<i64: 1, 32>}, {pipeline_mode = #tpu.pipeline_mode<synchronous>, transform_indices = @transform_6, window_bounds = array<i64: 1, 32>}, {pipeline_mode = #tpu.pipeline_mode<synchronous>, transform_indices = @transform_7, window_bounds = array<i64: 32, 64>}, {pipeline_mode = #tpu.pipeline_mode<synchronous>, transform_indices = @transform_8, window_bounds = array<i64: 1, 64>}, {pipeline_mode = #tpu.pipeline_mode<synchronous>, transform_indices = @transform_9, window_bounds = array<i64: 64, 32>}, {pipeline_mode = #tpu.pipeline_mode<synchronous>, transform_indices = @transform_10, window_bounds = array<i64: 1, 32>}, {pipeline_mode = #tpu.pipeline_mode<synchronous>, transform_indices = @transform_11, window_bounds = array<i64: 1, 32>}, {pipeline_mode = #tpu.pipeline_mode<synchronous>, transform_indices = @transform_12, window_bounds = array<i64: 1, 32>}, {transform_indices = @transform_13, window_bounds = array<i64: 2, 8, 32>}]} {
    %c0 = arith.constant 0 : index
    %c0_0 = arith.constant 0 : index
    %c0_1 = arith.constant 0 : index
    %0 = vector.load %arg1[%c0, %c0_0, %c0_1] : memref<2x8x32xf32, #tpu.memory_space<vmem>>, vector<2x8x32xf32>
    %1 = vector.shape_cast %0 : vector<2x8x32xf32> to vector<16x32xf32>
    %c0_2 = arith.constant 0 : index
    %c0_3 = arith.constant 0 : index
    %2 = vector.load %arg2[%c0_2, %c0_3] : memref<32x96xf32, #tpu.memory_space<vmem>>, vector<32x96xf32>
    %cst = arith.constant dense<0.000000e+00> : vector<16x96xf32>
    %3 = tpu.matmul %1, %2, %cst {dimension_numbers = #tpu.dot_dimension_numbers<[1], [0], [0], [1], [0, 0, 1, 1], [], []>} : vector<16x32xf32>, vector<32x96xf32>, vector<16x96xf32> -> vector<16x96xf32>
    %c0_4 = arith.constant 0 : index
    %c0_5 = arith.constant 0 : index
    %4 = vector.load %arg3[%c0_4, %c0_5] : memref<1x96xf32, #tpu.memory_space<vmem>>, vector<1x96xf32>
    %5 = vector.broadcast %4 : vector<1x96xf32> to vector<16x96xf32>
    %6 = arith.addf %3, %5 : vector<16x96xf32>
    %7 = vector.extract_strided_slice %6 {offsets = [0, 0], sizes = [16, 32], strides = [1, 1]} : vector<16x96xf32> to vector<16x32xf32>
    %8 = vector.shape_cast %7 : vector<16x32xf32> to vector<2x8x32xf32>
    %9 = vector.extract_strided_slice %6 {offsets = [0, 32], sizes = [16, 32], strides = [1, 1]} : vector<16x96xf32> to vector<16x32xf32>
    %10 = vector.shape_cast %9 : vector<16x32xf32> to vector<2x8x32xf32>
    %11 = vector.extract_strided_slice %6 {offsets = [0, 64], sizes = [16, 32], strides = [1, 1]} : vector<16x96xf32> to vector<16x32xf32>
    %12 = vector.shape_cast %11 : vector<16x32xf32> to vector<2x8x32xf32>
    %c0_6 = arith.constant 0 : index
    %c0_7 = arith.constant 0 : index
    %13 = vector.load %arg4[%c0_6, %c0_7] : memref<32x32xf32, #tpu.memory_space<vmem>>, vector<32x32xf32>
    %cst_8 = arith.constant 0.000000e+00 : f32
    %14 = vector.broadcast %cst_8 : f32 to vector<16x32xf32>
    %15 = vector.extract_strided_slice %8 {offsets = [0, 0, 0], sizes = [2, 8, 8], strides = [1, 1, 1]} : vector<2x8x32xf32> to vector<2x8x8xf32>
    %16 = vector.extract_strided_slice %10 {offsets = [0, 0, 0], sizes = [2, 8, 8], strides = [1, 1, 1]} : vector<2x8x32xf32> to vector<2x8x8xf32>
    %17 = vector.extract_strided_slice %12 {offsets = [0, 0, 0], sizes = [2, 8, 8], strides = [1, 1, 1]} : vector<2x8x32xf32> to vector<2x8x8xf32>
    "tpu.trace_start"() <{level = 10 : i32, message = "bqd,bkd->bqk"}> : () -> ()
    %cst_9 = arith.constant dense<0.000000e+00> : vector<2x8x8xf32>
    %18 = tpu.matmul %15, %16, %cst_9 {dimension_numbers = #tpu.dot_dimension_numbers<[2], [2], [1], [1], [0, 0, 0, 1, 1, 1], [0], [0]>} : vector<2x8x8xf32>, vector<2x8x8xf32>, vector<2x8x8xf32> -> vector<2x8x8xf32>
    "tpu.trace_stop"() : () -> ()
    %cst_10 = arith.constant 0.353553385 : f32
    %19 = vector.broadcast %cst_10 : f32 to vector<2x8x8xf32>
    %20 = arith.mulf %18, %19 : vector<2x8x8xf32>
    %cst_11 = arith.constant dense<0xFF800000> : vector<2x8xf32>
    %21 = vector.multi_reduction <maximumf>, %20, %cst_11 [2] : vector<2x8x8xf32> to vector<2x8xf32>
    %22 = vector.shape_cast %21 : vector<2x8xf32> to vector<2x8x1xf32>
    %23 = vector.broadcast %22 : vector<2x8x1xf32> to vector<2x8x8xf32>
    %24 = arith.subf %20, %23 : vector<2x8x8xf32>
    %25 = math.exp %24 : vector<2x8x8xf32>
    %cst_12 = arith.constant dense<0.000000e+00> : vector<2x8xf32>
    %26 = vector.multi_reduction <add>, %25, %cst_12 [2] : vector<2x8x8xf32> to vector<2x8xf32>
    %27 = vector.shape_cast %26 : vector<2x8xf32> to vector<2x8x1xf32>
    %28 = tpu.reciprocal %27 {approx = true} : vector<2x8x1xf32> -> vector<2x8x1xf32>
    %29 = vector.broadcast %28 : vector<2x8x1xf32> to vector<2x8x8xf32>
    %30 = arith.mulf %25, %29 : vector<2x8x8xf32>
    "tpu.trace_start"() <{level = 10 : i32, message = "bqk,bkd->bqd"}> : () -> ()
    %cst_13 = arith.constant dense<0.000000e+00> : vector<2x8x8xf32>
    %31 = tpu.matmul %30, %17, %cst_13 {dimension_numbers = #tpu.dot_dimension_numbers<[2], [1], [1], [2], [0, 0, 0, 1, 1, 2], [0], [0]>} : vector<2x8x8xf32>, vector<2x8x8xf32>, vector<2x8x8xf32> -> vector<2x8x8xf32>
    "tpu.trace_stop"() : () -> ()
    %32 = vector.shape_cast %31 : vector<2x8x8xf32> to vector<16x8xf32>
    %33 = vector.extract_strided_slice %13 {offsets = [0, 0], sizes = [8, 32], strides = [1, 1]} : vector<32x32xf32> to vector<8x32xf32>
    %cst_14 = arith.constant dense<0.000000e+00> : vector<16x32xf32>
    %34 = tpu.matmul %32, %33, %cst_14 {dimension_numbers = #tpu.dot_dimension_numbers<[1], [0], [0], [1], [0, 0, 1, 1], [], []>} : vector<16x8xf32>, vector<8x32xf32>, vector<16x32xf32> -> vector<16x32xf32>
    %35 = arith.addf %14, %34 : vector<16x32xf32>
    %36 = vector.extract_strided_slice %8 {offsets = [0, 0, 8], sizes = [2, 8, 8], strides = [1, 1, 1]} : vector<2x8x32xf32> to vector<2x8x8xf32>
    %37 = vector.extract_strided_slice %10 {offsets = [0, 0, 8], sizes = [2, 8, 8], strides = [1, 1, 1]} : vector<2x8x32xf32> to vector<2x8x8xf32>
    %38 = vector.extract_strided_slice %12 {offsets = [0, 0, 8], sizes = [2, 8, 8], strides = [1, 1, 1]} : vector<2x8x32xf32> to vector<2x8x8xf32>
    "tpu.trace_start"() <{level = 10 : i32, message = "bqd,bkd->bqk"}> : () -> ()
    %cst_15 = arith.constant dense<0.000000e+00> : vector<2x8x8xf32>
    %39 = tpu.matmul %36, %37, %cst_15 {dimension_numbers = #tpu.dot_dimension_numbers<[2], [2], [1], [1], [0, 0, 0, 1, 1, 1], [0], [0]>} : vector<2x8x8xf32>, vector<2x8x8xf32>, vector<2x8x8xf32> -> vector<2x8x8xf32>
    "tpu.trace_stop"() : () -> ()
    %cst_16 = arith.constant 0.353553385 : f32
    %40 = vector.broadcast %cst_16 : f32 to vector<2x8x8xf32>
    %41 = arith.mulf %39, %40 : vector<2x8x8xf32>
    %cst_17 = arith.constant dense<0xFF800000> : vector<2x8xf32>
    %42 = vector.multi_reduction <maximumf>, %41, %cst_17 [2] : vector<2x8x8xf32> to vector<2x8xf32>
    %43 = vector.shape_cast %42 : vector<2x8xf32> to vector<2x8x1xf32>
    %44 = vector.broadcast %43 : vector<2x8x1xf32> to vector<2x8x8xf32>
    %45 = arith.subf %41, %44 : vector<2x8x8xf32>
    %46 = math.exp %45 : vector<2x8x8xf32>
    %cst_18 = arith.constant dense<0.000000e+00> : vector<2x8xf32>
    %47 = vector.multi_reduction <add>, %46, %cst_18 [2] : vector<2x8x8xf32> to vector<2x8xf32>
    %48 = vector.shape_cast %47 : vector<2x8xf32> to vector<2x8x1xf32>
    %49 = tpu.reciprocal %48 {approx = true} : vector<2x8x1xf32> -> vector<2x8x1xf32>
    %50 = vector.broadcast %49 : vector<2x8x1xf32> to vector<2x8x8xf32>
    %51 = arith.mulf %46, %50 : vector<2x8x8xf32>
    "tpu.trace_start"() <{level = 10 : i32, message = "bqk,bkd->bqd"}> : () -> ()
    %cst_19 = arith.constant dense<0.000000e+00> : vector<2x8x8xf32>
    %52 = tpu.matmul %51, %38, %cst_19 {dimension_numbers = #tpu.dot_dimension_numbers<[2], [1], [1], [2], [0, 0, 0, 1, 1, 2], [0], [0]>} : vector<2x8x8xf32>, vector<2x8x8xf32>, vector<2x8x8xf32> -> vector<2x8x8xf32>
    "tpu.trace_stop"() : () -> ()
    %53 = vector.shape_cast %52 : vector<2x8x8xf32> to vector<16x8xf32>
    %54 = vector.extract_strided_slice %13 {offsets = [8, 0], sizes = [8, 32], strides = [1, 1]} : vector<32x32xf32> to vector<8x32xf32>
    %cst_20 = arith.constant dense<0.000000e+00> : vector<16x32xf32>
    %55 = tpu.matmul %53, %54, %cst_20 {dimension_numbers = #tpu.dot_dimension_numbers<[1], [0], [0], [1], [0, 0, 1, 1], [], []>} : vector<16x8xf32>, vector<8x32xf32>, vector<16x32xf32> -> vector<16x32xf32>
    %56 = arith.addf %35, %55 : vector<16x32xf32>
    %57 = vector.extract_strided_slice %8 {offsets = [0, 0, 16], sizes = [2, 8, 8], strides = [1, 1, 1]} : vector<2x8x32xf32> to vector<2x8x8xf32>
    %58 = vector.extract_strided_slice %10 {offsets = [0, 0, 16], sizes = [2, 8, 8], strides = [1, 1, 1]} : vector<2x8x32xf32> to vector<2x8x8xf32>
    %59 = vector.extract_strided_slice %12 {offsets = [0, 0, 16], sizes = [2, 8, 8], strides = [1, 1, 1]} : vector<2x8x32xf32> to vector<2x8x8xf32>
    "tpu.trace_start"() <{level = 10 : i32, message = "bqd,bkd->bqk"}> : () -> ()
    %cst_21 = arith.constant dense<0.000000e+00> : vector<2x8x8xf32>
    %60 = tpu.matmul %57, %58, %cst_21 {dimension_numbers = #tpu.dot_dimension_numbers<[2], [2], [1], [1], [0, 0, 0, 1, 1, 1], [0], [0]>} : vector<2x8x8xf32>, vector<2x8x8xf32>, vector<2x8x8xf32> -> vector<2x8x8xf32>
    "tpu.trace_stop"() : () -> ()
    %cst_22 = arith.constant 0.353553385 : f32
    %61 = vector.broadcast %cst_22 : f32 to vector<2x8x8xf32>
    %62 = arith.mulf %60, %61 : vector<2x8x8xf32>
    %cst_23 = arith.constant dense<0xFF800000> : vector<2x8xf32>
    %63 = vector.multi_reduction <maximumf>, %62, %cst_23 [2] : vector<2x8x8xf32> to vector<2x8xf32>
    %64 = vector.shape_cast %63 : vector<2x8xf32> to vector<2x8x1xf32>
    %65 = vector.broadcast %64 : vector<2x8x1xf32> to vector<2x8x8xf32>
    %66 = arith.subf %62, %65 : vector<2x8x8xf32>
    %67 = math.exp %66 : vector<2x8x8xf32>
    %cst_24 = arith.constant dense<0.000000e+00> : vector<2x8xf32>
    %68 = vector.multi_reduction <add>, %67, %cst_24 [2] : vector<2x8x8xf32> to vector<2x8xf32>
    %69 = vector.shape_cast %68 : vector<2x8xf32> to vector<2x8x1xf32>
    %70 = tpu.reciprocal %69 {approx = true} : vector<2x8x1xf32> -> vector<2x8x1xf32>
    %71 = vector.broadcast %70 : vector<2x8x1xf32> to vector<2x8x8xf32>
    %72 = arith.mulf %67, %71 : vector<2x8x8xf32>
    "tpu.trace_start"() <{level = 10 : i32, message = "bqk,bkd->bqd"}> : () -> ()
    %cst_25 = arith.constant dense<0.000000e+00> : vector<2x8x8xf32>
    %73 = tpu.matmul %72, %59, %cst_25 {dimension_numbers = #tpu.dot_dimension_numbers<[2], [1], [1], [2], [0, 0, 0, 1, 1, 2], [0], [0]>} : vector<2x8x8xf32>, vector<2x8x8xf32>, vector<2x8x8xf32> -> vector<2x8x8xf32>
    "tpu.trace_stop"() : () -> ()
    %74 = vector.shape_cast %73 : vector<2x8x8xf32> to vector<16x8xf32>
    %75 = vector.extract_strided_slice %13 {offsets = [16, 0], sizes = [8, 32], strides = [1, 1]} : vector<32x32xf32> to vector<8x32xf32>
    %cst_26 = arith.constant dense<0.000000e+00> : vector<16x32xf32>
    %76 = tpu.matmul %74, %75, %cst_26 {dimension_numbers = #tpu.dot_dimension_numbers<[1], [0], [0], [1], [0, 0, 1, 1], [], []>} : vector<16x8xf32>, vector<8x32xf32>, vector<16x32xf32> -> vector<16x32xf32>
    %77 = arith.addf %56, %76 : vector<16x32xf32>
    %78 = vector.extract_strided_slice %8 {offsets = [0, 0, 24], sizes = [2, 8, 8], strides = [1, 1, 1]} : vector<2x8x32xf32> to vector<2x8x8xf32>
    %79 = vector.extract_strided_slice %10 {offsets = [0, 0, 24], sizes = [2, 8, 8], strides = [1, 1, 1]} : vector<2x8x32xf32> to vector<2x8x8xf32>
    %80 = vector.extract_strided_slice %12 {offsets = [0, 0, 24], sizes = [2, 8, 8], strides = [1, 1, 1]} : vector<2x8x32xf32> to vector<2x8x8xf32>
    "tpu.trace_start"() <{level = 10 : i32, message = "bqd,bkd->bqk"}> : () -> ()
    %cst_27 = arith.constant dense<0.000000e+00> : vector<2x8x8xf32>
    %81 = tpu.matmul %78, %79, %cst_27 {dimension_numbers = #tpu.dot_dimension_numbers<[2], [2], [1], [1], [0, 0, 0, 1, 1, 1], [0], [0]>} : vector<2x8x8xf32>, vector<2x8x8xf32>, vector<2x8x8xf32> -> vector<2x8x8xf32>
    "tpu.trace_stop"() : () -> ()
    %cst_28 = arith.constant 0.353553385 : f32
    %82 = vector.broadcast %cst_28 : f32 to vector<2x8x8xf32>
    %83 = arith.mulf %81, %82 : vector<2x8x8xf32>
    %cst_29 = arith.constant dense<0xFF800000> : vector<2x8xf32>
    %84 = vector.multi_reduction <maximumf>, %83, %cst_29 [2] : vector<2x8x8xf32> to vector<2x8xf32>
    %85 = vector.shape_cast %84 : vector<2x8xf32> to vector<2x8x1xf32>
    %86 = vector.broadcast %85 : vector<2x8x1xf32> to vector<2x8x8xf32>
    %87 = arith.subf %83, %86 : vector<2x8x8xf32>
    %88 = math.exp %87 : vector<2x8x8xf32>
    %cst_30 = arith.constant dense<0.000000e+00> : vector<2x8xf32>
    %89 = vector.multi_reduction <add>, %88, %cst_30 [2] : vector<2x8x8xf32> to vector<2x8xf32>
    %90 = vector.shape_cast %89 : vector<2x8xf32> to vector<2x8x1xf32>
    %91 = tpu.reciprocal %90 {approx = true} : vector<2x8x1xf32> -> vector<2x8x1xf32>
    %92 = vector.broadcast %91 : vector<2x8x1xf32> to vector<2x8x8xf32>
    %93 = arith.mulf %88, %92 : vector<2x8x8xf32>
    "tpu.trace_start"() <{level = 10 : i32, message = "bqk,bkd->bqd"}> : () -> ()
    %cst_31 = arith.constant dense<0.000000e+00> : vector<2x8x8xf32>
    %94 = tpu.matmul %93, %80, %cst_31 {dimension_numbers = #tpu.dot_dimension_numbers<[2], [1], [1], [2], [0, 0, 0, 1, 1, 2], [0], [0]>} : vector<2x8x8xf32>, vector<2x8x8xf32>, vector<2x8x8xf32> -> vector<2x8x8xf32>
    "tpu.trace_stop"() : () -> ()
    %95 = vector.shape_cast %94 : vector<2x8x8xf32> to vector<16x8xf32>
    %96 = vector.extract_strided_slice %13 {offsets = [24, 0], sizes = [8, 32], strides = [1, 1]} : vector<32x32xf32> to vector<8x32xf32>
    %cst_32 = arith.constant dense<0.000000e+00> : vector<16x32xf32>
    %97 = tpu.matmul %95, %96, %cst_32 {dimension_numbers = #tpu.dot_dimension_numbers<[1], [0], [0], [1], [0, 0, 1, 1], [], []>} : vector<16x8xf32>, vector<8x32xf32>, vector<16x32xf32> -> vector<16x32xf32>
    %98 = arith.addf %77, %97 : vector<16x32xf32>
    %c0_33 = arith.constant 0 : index
    %c0_34 = arith.constant 0 : index
    %99 = vector.load %arg5[%c0_33, %c0_34] : memref<1x32xf32, #tpu.memory_space<vmem>>, vector<1x32xf32>
    %100 = vector.broadcast %99 : vector<1x32xf32> to vector<16x32xf32>
    %101 = arith.addf %98, %100 : vector<16x32xf32>
    %102 = arith.addf %101, %1 : vector<16x32xf32>
    %c0_35 = arith.constant 0 : index
    %c0_36 = arith.constant 0 : index
    %103 = vector.load %arg6[%c0_35, %c0_36] : memref<1x32xf32, #tpu.memory_space<vmem>>, vector<1x32xf32>
    %c0_37 = arith.constant 0 : index
    %c0_38 = arith.constant 0 : index
    %104 = vector.load %arg7[%c0_37, %c0_38] : memref<1x32xf32, #tpu.memory_space<vmem>>, vector<1x32xf32>
    %cst_39 = arith.constant dense<0.000000e+00> : vector<16xf32>
    %105 = vector.multi_reduction <add>, %102, %cst_39 [1] : vector<16x32xf32> to vector<16xf32>
    %106 = vector.shape_cast %105 : vector<16xf32> to vector<16x1xf32>
    %cst_40 = arith.constant 3.200000e+01 : f32
    %107 = vector.broadcast %cst_40 : f32 to vector<16x1xf32>
    %108 = arith.divf %106, %107 : vector<16x1xf32>
    %109 = vector.broadcast %108 : vector<16x1xf32> to vector<16x32xf32>
    %110 = arith.subf %102, %109 : vector<16x32xf32>
    %111 = arith.mulf %110, %110 : vector<16x32xf32>
    %cst_41 = arith.constant dense<0.000000e+00> : vector<16xf32>
    %112 = vector.multi_reduction <add>, %111, %cst_41 [1] : vector<16x32xf32> to vector<16xf32>
    %113 = vector.shape_cast %112 : vector<16xf32> to vector<16x1xf32>
    %cst_42 = arith.constant 3.200000e+01 : f32
    %114 = vector.broadcast %cst_42 : f32 to vector<16x1xf32>
    %115 = arith.divf %113, %114 : vector<16x1xf32>
    %116 = vector.broadcast %108 : vector<16x1xf32> to vector<16x32xf32>
    %117 = arith.subf %102, %116 : vector<16x32xf32>
    %cst_43 = arith.constant 9.99999974E-6 : f32
    %118 = vector.broadcast %cst_43 : f32 to vector<16x1xf32>
    %119 = arith.addf %115, %118 : vector<16x1xf32>
    %120 = math.rsqrt %119 : vector<16x1xf32>
    %121 = vector.broadcast %120 : vector<16x1xf32> to vector<16x32xf32>
    %122 = arith.mulf %117, %121 : vector<16x32xf32>
    %123 = vector.broadcast %103 : vector<1x32xf32> to vector<16x32xf32>
    %124 = arith.mulf %122, %123 : vector<16x32xf32>
    %125 = vector.broadcast %104 : vector<1x32xf32> to vector<16x32xf32>
    %126 = arith.addf %124, %125 : vector<16x32xf32>
    %c0_44 = arith.constant 0 : index
    %c0_45 = arith.constant 0 : index
    %127 = vector.load %arg8[%c0_44, %c0_45] : memref<32x64xf32, #tpu.memory_space<vmem>>, vector<32x64xf32>
    %cst_46 = arith.constant dense<0.000000e+00> : vector<16x64xf32>
    %128 = tpu.matmul %126, %127, %cst_46 {dimension_numbers = #tpu.dot_dimension_numbers<[1], [0], [0], [1], [0, 0, 1, 1], [], []>} : vector<16x32xf32>, vector<32x64xf32>, vector<16x64xf32> -> vector<16x64xf32>
    %c0_47 = arith.constant 0 : index
    %c0_48 = arith.constant 0 : index
    %129 = vector.load %arg9[%c0_47, %c0_48] : memref<1x64xf32, #tpu.memory_space<vmem>>, vector<1x64xf32>
    %130 = vector.broadcast %129 : vector<1x64xf32> to vector<16x64xf32>
    %131 = arith.addf %128, %130 : vector<16x64xf32>
    %cst_49 = arith.constant 0.000000e+00 : f32
    %132 = vector.broadcast %cst_49 : f32 to vector<16x64xf32>
    %133 = arith.maximumf %131, %132 : vector<16x64xf32>
    %c0_50 = arith.constant 0 : index
    %c0_51 = arith.constant 0 : index
    %134 = vector.load %arg10[%c0_50, %c0_51] : memref<64x32xf32, #tpu.memory_space<vmem>>, vector<64x32xf32>
    %cst_52 = arith.constant dense<0.000000e+00> : vector<16x32xf32>
    %135 = tpu.matmul %133, %134, %cst_52 {dimension_numbers = #tpu.dot_dimension_numbers<[1], [0], [0], [1], [0, 0, 1, 1], [], []>} : vector<16x64xf32>, vector<64x32xf32>, vector<16x32xf32> -> vector<16x32xf32>
    %c0_53 = arith.constant 0 : index
    %c0_54 = arith.constant 0 : index
    %136 = vector.load %arg11[%c0_53, %c0_54] : memref<1x32xf32, #tpu.memory_space<vmem>>, vector<1x32xf32>
    %137 = vector.broadcast %136 : vector<1x32xf32> to vector<16x32xf32>
    %138 = arith.addf %135, %137 : vector<16x32xf32>
    %139 = arith.addf %138, %126 : vector<16x32xf32>
    %c0_55 = arith.constant 0 : index
    %c0_56 = arith.constant 0 : index
    %140 = vector.load %arg12[%c0_55, %c0_56] : memref<1x32xf32, #tpu.memory_space<vmem>>, vector<1x32xf32>
    %c0_57 = arith.constant 0 : index
    %c0_58 = arith.constant 0 : index
    %141 = vector.load %arg13[%c0_57, %c0_58] : memref<1x32xf32, #tpu.memory_space<vmem>>, vector<1x32xf32>
    %cst_59 = arith.constant dense<0.000000e+00> : vector<16xf32>
    %142 = vector.multi_reduction <add>, %139, %cst_59 [1] : vector<16x32xf32> to vector<16xf32>
    %143 = vector.shape_cast %142 : vector<16xf32> to vector<16x1xf32>
    %cst_60 = arith.constant 3.200000e+01 : f32
    %144 = vector.broadcast %cst_60 : f32 to vector<16x1xf32>
    %145 = arith.divf %143, %144 : vector<16x1xf32>
    %146 = vector.broadcast %145 : vector<16x1xf32> to vector<16x32xf32>
    %147 = arith.subf %139, %146 : vector<16x32xf32>
    %148 = arith.mulf %147, %147 : vector<16x32xf32>
    %cst_61 = arith.constant dense<0.000000e+00> : vector<16xf32>
    %149 = vector.multi_reduction <add>, %148, %cst_61 [1] : vector<16x32xf32> to vector<16xf32>
    %150 = vector.shape_cast %149 : vector<16xf32> to vector<16x1xf32>
    %cst_62 = arith.constant 3.200000e+01 : f32
    %151 = vector.broadcast %cst_62 : f32 to vector<16x1xf32>
    %152 = arith.divf %150, %151 : vector<16x1xf32>
    %153 = vector.broadcast %145 : vector<16x1xf32> to vector<16x32xf32>
    %154 = arith.subf %139, %153 : vector<16x32xf32>
    %cst_63 = arith.constant 9.99999974E-6 : f32
    %155 = vector.broadcast %cst_63 : f32 to vector<16x1xf32>
    %156 = arith.addf %152, %155 : vector<16x1xf32>
    %157 = math.rsqrt %156 : vector<16x1xf32>
    %158 = vector.broadcast %157 : vector<16x1xf32> to vector<16x32xf32>
    %159 = arith.mulf %154, %158 : vector<16x32xf32>
    %160 = vector.broadcast %140 : vector<1x32xf32> to vector<16x32xf32>
    %161 = arith.mulf %159, %160 : vector<16x32xf32>
    %162 = vector.broadcast %141 : vector<1x32xf32> to vector<16x32xf32>
    %163 = arith.addf %161, %162 : vector<16x32xf32>
    %164 = vector.shape_cast %163 : vector<16x32xf32> to vector<2x8x32xf32>
    %c0_64 = arith.constant 0 : index
    %c0_65 = arith.constant 0 : index
    %c0_66 = arith.constant 0 : index
    %165 = vector.load %arg14[%c0_64, %c0_65, %c0_66] : memref<2x8x32xf32, #tpu.memory_space<vmem>>, vector<2x8x32xf32>
    tpu.vector_store %arg14[%c0_64, %c0_65, %c0_66], %164 {strides = array<i32>} : memref<2x8x32xf32, #tpu.memory_space<vmem>>, vector<2x8x32xf32>,
    return
  }
  func.func @transform_0(%arg0: i32) -> (i32, i32, i32) {
    %c0_i32 = arith.constant 0 : i32
    %c0_i32_0 = arith.constant 0 : i32
    %c0_i32_1 = arith.constant 0 : i32
    return %arg0, %c0_i32, %c0_i32_0 : i32, i32, i32
  }
  func.func @transform_1(%arg0: i32) -> (i32, i32) {
    %c0_i32 = arith.constant 0 : i32
    %c0_i32_0 = arith.constant 0 : i32
    %c0_i32_1 = arith.constant 0 : i32
    return %c0_i32, %c0_i32_0 : i32, i32
  }
  func.func @transform_2(%arg0: i32) -> (i32, i32) {
    %c0_i32 = arith.constant 0 : i32
    %c0_i32_0 = arith.constant 0 : i32
    %c0_i32_1 = arith.constant 0 : i32
    return %c0_i32, %c0_i32_0 : i32, i32
  }
  func.func @transform_3(%arg0: i32) -> (i32, i32) {
    %c0_i32 = arith.constant 0 : i32
    %c0_i32_0 = arith.constant 0 : i32
    %c0_i32_1 = arith.constant 0 : i32
    return %c0_i32, %c0_i32_0 : i32, i32
  }
  func.func @transform_4(%arg0: i32) -> (i32, i32) {
    %c0_i32 = arith.constant 0 : i32
    %c0_i32_0 = arith.constant 0 : i32
    %c0_i32_1 = arith.constant 0 : i32
    return %c0_i32, %c0_i32_0 : i32, i32
  }
  func.func @transform_5(%arg0: i32) -> (i32, i32) {
    %c0_i32 = arith.constant 0 : i32
    %c0_i32_0 = arith.constant 0 : i32
    %c0_i32_1 = arith.constant 0 : i32
    return %c0_i32, %c0_i32_0 : i32, i32
  }
  func.func @transform_6(%arg0: i32) -> (i32, i32) {
    %c0_i32 = arith.constant 0 : i32
    %c0_i32_0 = arith.constant 0 : i32
    %c0_i32_1 = arith.constant 0 : i32
    return %c0_i32, %c0_i32_0 : i32, i32
  }
  func.func @transform_7(%arg0: i32) -> (i32, i32) {
    %c0_i32 = arith.constant 0 : i32
    %c0_i32_0 = arith.constant 0 : i32
    %c0_i32_1 = arith.constant 0 : i32
    return %c0_i32, %c0_i32_0 : i32, i32
  }
  func.func @transform_8(%arg0: i32) -> (i32, i32) {
    %c0_i32 = arith.constant 0 : i32
    %c0_i32_0 = arith.constant 0 : i32
    %c0_i32_1 = arith.constant 0 : i32
    return %c0_i32, %c0_i32_0 : i32, i32
  }
  func.func @transform_9(%arg0: i32) -> (i32, i32) {
    %c0_i32 = arith.constant 0 : i32
    %c0_i32_0 = arith.constant 0 : i32
    %c0_i32_1 = arith.constant 0 : i32
    return %c0_i32, %c0_i32_0 : i32, i32
  }
  func.func @transform_10(%arg0: i32) -> (i32, i32) {
    %c0_i32 = arith.constant 0 : i32
    %c0_i32_0 = arith.constant 0 : i32
    %c0_i32_1 = arith.constant 0 : i32
    return %c0_i32, %c0_i32_0 : i32, i32
  }
  func.func @transform_11(%arg0: i32) -> (i32, i32) {
    %c0_i32 = arith.constant 0 : i32
    %c0_i32_0 = arith.constant 0 : i32
    %c0_i32_1 = arith.constant 0 : i32
    return %c0_i32, %c0_i32_0 : i32, i32
  }
  func.func @transform_12(%arg0: i32) -> (i32, i32) {
    %c0_i32 = arith.constant 0 : i32
    %c0_i32_0 = arith.constant 0 : i32
    %c0_i32_1 = arith.constant 0 : i32
    return %c0_i32, %c0_i32_0 : i32, i32
  }
  func.func @transform_13(%arg0: i32) -> (i32, i32, i32) {
    %c0_i32 = arith.constant 0 : i32
    %c0_i32_0 = arith.constant 0 : i32
    %c0_i32_1 = arith.constant 0 : i32
    return %arg0, %c0_i32, %c0_i32_0 : i32, i32, i32
  }
}

</mosaic_0001>

<llo_original>
// kernel: tpu_custom_call.1
$region0: #{tpu_custom_call.1}
  #allocation0 [shape = 'u32[]', space=smem, size = 0x4, offset = 0x4, fixed_abs, tag = 'smem constant byte address 0x4 - core index']
  #allocation1 [shape = 'u32[144,128]{1,0:T(1,128)}', space=vmem, size = 0x12000, scoped, tag = 'internal scratch']
  %s0 = inlined_call_operand.hbm [shape: f32[2,8,32], index: 0, kind: input, shape index: {}]
  %s1 = inlined_call_operand.vmem [shape: f32[32,96], index: 1, kind: input, shape index: {}]
  %s2 = inlined_call_operand.vmem [shape: f32[1,96], index: 2, kind: input, shape index: {}]
  %s3 = inlined_call_operand.vmem [shape: f32[32,32], index: 3, kind: input, shape index: {}]
  %s4 = inlined_call_operand.vmem [shape: f32[1,32], index: 4, kind: input, shape index: {}]
  %s5 = inlined_call_operand.vmem [shape: f32[1,32], index: 5, kind: input, shape index: {}]
  %s6 = inlined_call_operand.vmem [shape: f32[1,32], index: 6, kind: input, shape index: {}]
  %s7 = inlined_call_operand.vmem [shape: f32[32,64], index: 7, kind: input, shape index: {}]
  %s8 = inlined_call_operand.vmem [shape: f32[1,64], index: 8, kind: input, shape index: {}]
  %s9 = inlined_call_operand.vmem [shape: f32[64,32], index: 9, kind: input, shape index: {}]
  %s10 = inlined_call_operand.vmem [shape: f32[1,32], index: 10, kind: input, shape index: {}]
  %s11 = inlined_call_operand.vmem [shape: f32[1,32], index: 11, kind: input, shape index: {}]
  %s12 = inlined_call_operand.vmem [shape: f32[1,32], index: 12, kind: input, shape index: {}]
  %s13 = inlined_call_operand.hbm [shape: f32[2,8,32], index: 13, kind: output, shape index: {}]
  %s14 = sld [smem:[#allocation0]]
  $region66: #{tpu_custom_call.1} parent=0
    _
  %s16 = ssub.s32 1, %s14
  %s17 = scalar_select 0, %s16, %s14
  $region1: #{tpu_custom_call.1} parent=0
    #allocation2 [shape = 'u8[8192]{0}', space=vmem, size = 0x2000, scoped, tag = 'input window, operand 0, single buffered']
    #allocation3 [shape = 's32[1]{0}', space=sflag, size = 0x4, scoped, tag = 'scoped memory for tpu_custom_call.1']
    #allocation4 [shape = 's32[1]{0}', space=sflag, size = 0x4, scoped, tag = 'scoped memory for tpu_custom_call.1']
    #allocation5 [shape = 'u8[8192]{0}', space=vmem, size = 0x2000, scoped, tag = 'output window, operand 0, single buffered']
    %18 = vsyncpa [#allocation3], 0
    %19 = vsyncpa [#allocation4], 0
    // Predicated region
    $region2: #{tpu_custom_call.1} parent=1 // pred_check
      _
    $region3: #{tpu_custom_call.1} parent=1 // pred_check_branch
      %21 = sbr.rel (0) target = $region5
    $region4: #{tpu_custom_call.1} parent=1 // pred_region
      %s23 = ssub.s32 256, 256
      %24 = vsyncadd [#allocation3], %s23
      %s25 = sshll.u32 [#allocation2], 4
      %s26 = int_to_ptr.vmem [resolvable:$true] %s25
      %31 = dma.hbm_to_vmem [thread:$0]  %s0, 256, %s26, [#allocation3], 128, 128, 8
    $region5: #{tpu_custom_call.1} parent=1 // pred_fallthru
      _
    // Predicated region
    $region6: #{tpu_custom_call.1} parent=1 // pred_check
      _
    $region7: #{tpu_custom_call.1} parent=1 // pred_check_branch
      %33 = sbr.rel (0) target = $region9
    $region8: #{tpu_custom_call.1} parent=1 // pred_region
      _
    $region9: #{tpu_custom_call.1} parent=1 // pred_fallthru
      _
    // Predicated region
    $region10: #{tpu_custom_call.1} parent=1 // pred_check
      _
    $region11: #{tpu_custom_call.1} parent=1 // pred_check_branch
      %35 = sbr.rel (0) target = $region13
    $region12: #{tpu_custom_call.1} parent=1 // pred_region
      _
    $region13: #{tpu_custom_call.1} parent=1 // pred_fallthru
      _
    // Predicated region
    $region14: #{tpu_custom_call.1} parent=1 // pred_check
      _
    $region15: #{tpu_custom_call.1} parent=1 // pred_check_branch
      %37 = sbr.rel (0) target = $region17
    $region16: #{tpu_custom_call.1} parent=1 // pred_region
      _
    $region17: #{tpu_custom_call.1} parent=1 // pred_fallthru
      _
    // Predicated region
    $region18: #{tpu_custom_call.1} parent=1 // pred_check
      _
    $region19: #{tpu_custom_call.1} parent=1 // pred_check_branch
      %39 = sbr.rel (0) target = $region21
    $region20: #{tpu_custom_call.1} parent=1 // pred_region
      _
    $region21: #{tpu_custom_call.1} parent=1 // pred_fallthru
      _
    // Predicated region
    $region22: #{tpu_custom_call.1} parent=1 // pred_check
      _
    $region23: #{tpu_custom_call.1} parent=1 // pred_check_branch
      %41 = sbr.rel (0) target = $region25
    $region24: #{tpu_custom_call.1} parent=1 // pred_region
      _
    $region25: #{tpu_custom_call.1} parent=1 // pred_fallthru
      _
    // Predicated region
    $region26: #{tpu_custom_call.1} parent=1 // pred_check
      _
    $region27: #{tpu_custom_call.1} parent=1 // pred_check_branch
      %43 = sbr.rel (0) target = $region29
    $region28: #{tpu_custom_call.1} parent=1 // pred_region
      _
    $region29: #{tpu_custom_call.1} parent=1 // pred_fallthru
      _
    // Predicated region
    $region30: #{tpu_custom_call.1} parent=1 // pred_check
      _
    $region31: #{tpu_custom_call.1} parent=1 // pred_check_branch
      %45 = sbr.rel (0) target = $region33
    $region32: #{tpu_custom_call.1} parent=1 // pred_region
      _
    $region33: #{tpu_custom_call.1} parent=1 // pred_fallthru
      _
    // Predicated region
    $region34: #{tpu_custom_call.1} parent=1 // pred_check
      _
    $region35: #{tpu_custom_call.1} parent=1 // pred_check_branch
      %47 = sbr.rel (0) target = $region37
    $region36: #{tpu_custom_call.1} parent=1 // pred_region
      _
    $region37: #{tpu_custom_call.1} parent=1 // pred_fallthru
      _
    // Predicated region
    $region38: #{tpu_custom_call.1} parent=1 // pred_check
      _
    $region39: #{tpu_custom_call.1} parent=1 // pred_check_branch
      %49 = sbr.rel (0) target = $region41
    $region40: #{tpu_custom_call.1} parent=1 // pred_region
      _
    $region41: #{tpu_custom_call.1} parent=1 // pred_fallthru
      _
    // Predicated region
    $region42: #{tpu_custom_call.1} parent=1 // pred_check
      _
    $region43: #{tpu_custom_call.1} parent=1 // pred_check_branch
      %51 = sbr.rel (0) target = $region45
    $region44: #{tpu_custom_call.1} parent=1 // pred_region
      _
    $region45: #{tpu_custom_call.1} parent=1 // pred_fallthru
      _
    // Predicated region
    $region46: #{tpu_custom_call.1} parent=1 // pred_check
      _
    $region47: #{tpu_custom_call.1} parent=1 // pred_check_branch
      %53 = sbr.rel (0) target = $region49
    $region48: #{tpu_custom_call.1} parent=1 // pred_region
      _
    $region49: #{tpu_custom_call.1} parent=1 // pred_fallthru
      _
    // Predicated region
    $region50: #{tpu_custom_call.1} parent=1 // pred_check
      _
    $region51: #{tpu_custom_call.1} parent=1 // pred_check_branch
      %55 = sbr.rel (0) target = $region53
    $region52: #{tpu_custom_call.1} parent=1 // pred_region
      _
    $region53: #{tpu_custom_call.1} parent=1 // pred_fallthru
      _
    // Predicated region
    $region54: #{tpu_custom_call.1} parent=1 // pred_check
      _
    $region55: #{tpu_custom_call.1} parent=1 // pred_check_branch
      %57 = sbr.rel (0) target = $region57
    $region56: #{tpu_custom_call.1} parent=1 // pred_region
      %58 = dma.done [#allocation3], 256
    $region57: #{tpu_custom_call.1} parent=1 // pred_fallthru
      _
    %v59 = vld [vmem:[#allocation2] sm:$0xff]
    %v60 = vld [vmem:[#allocation2 + $0x8] sm:$0xff]
    %v61 = vld [vmem:[%s1] sm:$0xff]
    %v62 = vld [vmem:[%s1 + $0x8] sm:$0xff]
    %v63 = vld [vmem:[%s1 + $0x10] sm:$0xff]
    %v64 = vld [vmem:[%s1 + $0x18] sm:$0xff]
    %v65 = vld [vmem:[%s2] sm:$0x1]
    %v67 = vlaneseq
    %v68 = vshrl.u32 %v67, 7
    %v69 = vsub.s32 0, %v68
    %v70 = vrot.slane %v65, %v69
    %vm72 = vcmask 261120
    %v74 = vsel %vm72, %v59, 0
    %v77 = vsel %vm72, %v60, 0
    %79 = vmatprep.subr.mxu0 0.0
    %80 = vmatpush1.msra.mxu0 0.0
    %81 = vmatprep.subr.mxu0 0.0
    %82 = vmatpush1.msra.mxu0 0.0
    %83 = vmatprep.subr.mxu0 0.0
    %84 = vmatpush1.msra.mxu0 0.0
    %85 = vmatprep.subr.mxu0 0.0
    %86 = vmatpush1.msra.mxu0 0.0
    %87 = vmatprep.subr.mxu0 0.0
    %88 = vmatpush1.msra.mxu0 0.0
    %89 = vmatprep.subr.mxu0 0.0
    %90 = vmatpush1.msra.mxu0 0.0
    %91 = vmatprep.subr.mxu0 0.0
    %92 = vmatpush1.msra.mxu0 0.0
    %93 = vmatprep.subr.mxu0 0.0
    %94 = vmatpush1.msra.mxu0 0.0
    %95 = vmatprep.subr.mxu0 0.0
    %96 = vmatpush1.msra.mxu0 0.0
    %97 = vmatprep.subr.mxu0 0.0
    %98 = vmatpush1.msra.mxu0 0.0
    %99 = vmatprep.subr.mxu0 0.0
    %100 = vmatpush1.msra.mxu0 0.0
    %101 = vmatprep.subr.mxu0 0.0
    %102 = vmatpush1.msra.mxu0 0.0
    %103 = vmatprep.subr.mxu0 0.0
    %104 = vmatpush1.msra.mxu0 %v64
    %105 = vmatprep.subr.mxu0 0.0
    %106 = vmatpush1.msra.mxu0 %v63
    %107 = vmatprep.subr.mxu0 0.0
    %108 = vmatpush1.msra.mxu0 %v62
    %109 = vmatprep.subr.mxu0 0.0
    %110 = vmatpush1.msra.mxu0 %v61
    %111 = vmatprep.subr.mxu0 0.0
    %112 = vmatpush2.msra.mxu0 0.0
    %113 = vmatprep.subr.mxu0 0.0
    %114 = vmatpush2.msra.mxu0 0.0
    %115 = vmatprep.subr.mxu0 0.0
    %116 = vmatpush2.msra.mxu0 0.0
    %117 = vmatprep.subr.mxu0 0.0
    %118 = vmatpush2.msra.mxu0 0.0
    %119 = vmatprep.subr.mxu0 0.0
    %120 = vmatpush2.msra.mxu0 0.0
    %121 = vmatprep.subr.mxu0 0.0
    %122 = vmatpush2.msra.mxu0 0.0
    %123 = vmatprep.subr.mxu0 0.0
    %124 = vmatpush2.msra.mxu0 0.0
    %125 = vmatprep.subr.mxu0 0.0
    %126 = vmatpush2.msra.mxu0 0.0
    %127 = vmatprep.subr.mxu0 0.0
    %128 = vmatpush2.msra.mxu0 0.0
    %129 = vmatprep.subr.mxu0 0.0
    %130 = vmatpush2.msra.mxu0 0.0
    %131 = vmatprep.subr.mxu0 0.0
    %132 = vmatpush2.msra.mxu0 0.0
    %133 = vmatprep.subr.mxu0 0.0
    %134 = vmatpush2.msra.mxu0 0.0
    %135 = vmatprep.subr.mxu0 0.0
    %136 = vmatpush2.msra.mxu0 0.0
    %137 = vmatprep.subr.mxu0 0.0
    %138 = vmatpush2.msra.mxu0 0.0
    %139 = vmatprep.subr.mxu0 0.0
    %140 = vmatpush2.msra.mxu0 0.0
    %141 = vmatprep.subr.mxu0 0.0
    %142 = vmatpush2.msra.mxu0 0.0
    %143 = vmatprep.mubr.f32.mxu0 0.0
    %144 = vmatmul.mubr.f32.gmra.mxu0 %v74
    %v145 = vpop.f32.mrf.mxu0
    %v146 = vadd.f32 %v70, %v145
    %v147 = vpop.f32.mrf.mxu0
    %148 = vmatprep.mubr.f32.mxu0 0.0
    %149 = vmatmul.mubr.f32.gmra.mxu0 %v77
    %v150 = vpop.f32.mrf.mxu0
    %v151 = vadd.f32 %v70, %v150
    %v152 = vpop.f32.mrf.mxu0
    %153 = vdwg.mxu0
    %v154 = vld [vmem:[%s3] sm:$0xff]
    %v155 = vld [vmem:[%s3 + $0x8] sm:$0xff]
    %v156 = vld [vmem:[%s3 + $0x10] sm:$0xff]
    %v157 = vld [vmem:[%s3 + $0x18] sm:$0xff]
    %159 = vrot.lane.b32.xlu0 %v146, 96
    %v160 = vpop.permute.xlu0 %159
    %vm161 = vcmask 64512
    %v162 = vsel %vm161, %v146, 0
    %v164 = vsel %vm161, %v160, 0
    %166 = vmatprep.subr.mxu0 0.0
    %167 = vmatpush1.xpose.msra.mxu0 0.0
    %168 = vmatprep.subr.mxu0 0.0
    %169 = vmatpush1.xpose.msra.mxu0 0.0
    %170 = vmatprep.subr.mxu0 0.0
    %171 = vmatpush1.xpose.msra.mxu0 0.0
    %172 = vmatprep.subr.mxu0 0.0
    %173 = vmatpush1.xpose.msra.mxu0 0.0
    %174 = vmatprep.subr.mxu0 0.0
    %175 = vmatpush1.xpose.msra.mxu0 0.0
    %176 = vmatprep.subr.mxu0 0.0
    %177 = vmatpush1.xpose.msra.mxu0 0.0
    %178 = vmatprep.subr.mxu0 0.0
    %179 = vmatpush1.xpose.msra.mxu0 0.0
    %180 = vmatprep.subr.mxu0 0.0
    %181 = vmatpush1.xpose.msra.mxu0 0.0
    %182 = vmatprep.subr.mxu0 0.0
    %183 = vmatpush1.xpose.msra.mxu0 0.0
    %184 = vmatprep.subr.mxu0 0.0
    %185 = vmatpush1.xpose.msra.mxu0 0.0
    %186 = vmatprep.subr.mxu0 0.0
    %187 = vmatpush1.xpose.msra.mxu0 0.0
    %188 = vmatprep.subr.mxu0 0.0
    %189 = vmatpush1.xpose.msra.mxu0 0.0
    %190 = vmatprep.subr.mxu0 0.0
    %191 = vmatpush1.xpose.msra.mxu0 0.0
    %192 = vmatprep.subr.mxu0 0.0
    %193 = vmatpush1.xpose.msra.mxu0 0.0
    %194 = vmatprep.subr.mxu0 0.0
    %195 = vmatpush1.xpose.msra.mxu0 0.0
    %196 = vmatprep.subr.mxu0 0.0
    %197 = vmatpush1.xpose.msra.mxu0 %v164
    %198 = vmatprep.subr.mxu0 0.0
    %199 = vmatpush2.xpose.msra.mxu0 0.0
    %200 = vmatprep.subr.mxu0 0.0
    %201 = vmatpush2.xpose.msra.mxu0 0.0
    %202 = vmatprep.subr.mxu0 0.0
    %203 = vmatpush2.xpose.msra.mxu0 0.0
    %204 = vmatprep.subr.mxu0 0.0
    %205 = vmatpush2.xpose.msra.mxu0 0.0
    %206 = vmatprep.subr.mxu0 0.0
    %207 = vmatpush2.xpose.msra.mxu0 0.0
    %208 = vmatprep.subr.mxu0 0.0
    %209 = vmatpush2.xpose.msra.mxu0 0.0
    %210 = vmatprep.subr.mxu0 0.0
    %211 = vmatpush2.xpose.msra.mxu0 0.0
    %212 = vmatprep.subr.mxu0 0.0
    %213 = vmatpush2.xpose.msra.mxu0 0.0
    %214 = vmatprep.subr.mxu0 0.0
    %215 = vmatpush2.xpose.msra.mxu0 0.0
    %216 = vmatprep.subr.mxu0 0.0
    %217 = vmatpush2.xpose.msra.mxu0 0.0
    %218 = vmatprep.subr.mxu0 0.0
    %219 = vmatpush2.xpose.msra.mxu0 0.0
    %220 = vmatprep.subr.mxu0 0.0
    %221 = vmatpush2.xpose.msra.mxu0 0.0
    %222 = vmatprep.subr.mxu0 0.0
    %223 = vmatpush2.xpose.msra.mxu0 0.0
    %224 = vmatprep.subr.mxu0 0.0
    %225 = vmatpush2.xpose.msra.mxu0 0.0
    %226 = vmatprep.subr.mxu0 0.0
    %227 = vmatpush2.xpose.msra.mxu0 0.0
    %228 = vmatprep.subr.mxu0 0.0
    %229 = vmatpush2.xpose.msra.mxu0 0.0
    %230 = vmatprep.mubr.f32.mxu0 0.0
    %231 = vmatmul.mubr.f32.gmra.mxu0 %v162
    %v232 = vpop.f32.mrf.mxu0
    %v233 = vadd.f32 0.0, %v232
    %v234 = vpop.f32.mrf.mxu0
    %235 = vdwg.mxu0
    %237 = vrot.lane.b32.xlu0 %v151, 96
    %v238 = vpop.permute.xlu0 %237
    %v239 = vsel %vm161, %v151, 0
    %v241 = vsel %vm161, %v238, 0
    %243 = vmatprep.subr.mxu0 0.0
    %244 = vmatpush1.xpose.msra.mxu0 0.0
    %245 = vmatprep.subr.mxu0 0.0
    %246 = vmatpush1.xpose.msra.mxu0 0.0
    %247 = vmatprep.subr.mxu0 0.0
    %248 = vmatpush1.xpose.msra.mxu0 0.0
    %249 = vmatprep.subr.mxu0 0.0
    %250 = vmatpush1.xpose.msra.mxu0 0.0
    %251 = vmatprep.subr.mxu0 0.0
    %252 = vmatpush1.xpose.msra.mxu0 0.0
    %253 = vmatprep.subr.mxu0 0.0
    %254 = vmatpush1.xpose.msra.mxu0 0.0
    %255 = vmatprep.subr.mxu0 0.0
    %256 = vmatpush1.xpose.msra.mxu0 0.0
    %257 = vmatprep.subr.mxu0 0.0
    %258 = vmatpush1.xpose.msra.mxu0 0.0
    %259 = vmatprep.subr.mxu0 0.0
    %260 = vmatpush1.xpose.msra.mxu0 0.0
    %261 = vmatprep.subr.mxu0 0.0
    %262 = vmatpush1.xpose.msra.mxu0 0.0
    %263 = vmatprep.subr.mxu0 0.0
    %264 = vmatpush1.xpose.msra.mxu0 0.0
    %265 = vmatprep.subr.mxu0 0.0
    %266 = vmatpush1.xpose.msra.mxu0 0.0
    %267 = vmatprep.subr.mxu0 0.0
    %268 = vmatpush1.xpose.msra.mxu0 0.0
    %269 = vmatprep.subr.mxu0 0.0
    %270 = vmatpush1.xpose.msra.mxu0 0.0
    %271 = vmatprep.subr.mxu0 0.0
    %272 = vmatpush1.xpose.msra.mxu0 0.0
    %273 = vmatprep.subr.mxu0 0.0
    %274 = vmatpush1.xpose.msra.mxu0 %v241
    %275 = vmatprep.subr.mxu0 0.0
    %276 = vmatpush2.xpose.msra.mxu0 0.0
    %277 = vmatprep.subr.mxu0 0.0
    %278 = vmatpush2.xpose.msra.mxu0 0.0
    %279 = vmatprep.subr.mxu0 0.0
    %280 = vmatpush2.xpose.msra.mxu0 0.0
    %281 = vmatprep.subr.mxu0 0.0
    %282 = vmatpush2.xpose.msra.mxu0 0.0
    %283 = vmatprep.subr.mxu0 0.0
    %284 = vmatpush2.xpose.msra.mxu0 0.0
    %285 = vmatprep.subr.mxu0 0.0
    %286 = vmatpush2.xpose.msra.mxu0 0.0
    %287 = vmatprep.subr.mxu0 0.0
    %288 = vmatpush2.xpose.msra.mxu0 0.0
    %289 = vmatprep.subr.mxu0 0.0
    %290 = vmatpush2.xpose.msra.mxu0 0.0
    %291 = vmatprep.subr.mxu0 0.0
    %292 = vmatpush2.xpose.msra.mxu0 0.0
    %293 = vmatprep.subr.mxu0 0.0
    %294 = vmatpush2.xpose.msra.mxu0 0.0
    %295 = vmatprep.subr.mxu0 0.0
    %296 = vmatpush2.xpose.msra.mxu0 0.0
    %297 = vmatprep.subr.mxu0 0.0
    %298 = vmatpush2.xpose.msra.mxu0 0.0
    %299 = vmatprep.subr.mxu0 0.0
    %300 = vmatpush2.xpose.msra.mxu0 0.0
    %301 = vmatprep.subr.mxu0 0.0
    %302 = vmatpush2.xpose.msra.mxu0 0.0
    %303 = vmatprep.subr.mxu0 0.0
    %304 = vmatpush2.xpose.msra.mxu0 0.0
    %305 = vmatprep.subr.mxu0 0.0
    %306 = vmatpush2.xpose.msra.mxu0 0.0
    %307 = vmatprep.mubr.f32.mxu0 0.0
    %308 = vmatmul.mubr.f32.gmra.mxu0 %v239
    %v309 = vpop.f32.mrf.mxu0
    %v310 = vadd.f32 0.0, %v309
    %v311 = vpop.f32.mrf.mxu0
    %312 = vdwg.mxu0
    %v313 = vmul.f32 %v233, 0.35355338
    %v314 = vmul.f32 %v310, 0.35355338
    %v315 = vsel %vm161, %v313, -inf
    %316 = vmax.xlane.f32.xlu0 %v315
    %v317 = vpop.xlane.xlu0 %316
    %v318 = vsel %vm161, %v314, -inf
    %319 = vmax.xlane.f32.xlu0 %v318
    %v320 = vpop.xlane.xlu0 %319
    %v321 = vsub.f32 %v313, %v317
    %v322 = vsub.f32 %v314, %v320
    %v323 = vmul.f32 %v321, 1.442695
    %v324 = vpow.pop %v323
    %v325 = vmul.f32 %v322, 1.442695
    %v326 = vpow.pop %v325
    %v327 = vsel %vm161, %v324, 0.0
    %328 = vadd.xlane.f32.xlu0 %v327
    %v329 = vpop.xlane.xlu0 %328
    %v330 = vsel %vm161, %v326, 0.0
    %331 = vadd.xlane.f32.xlu0 %v330
    %v332 = vpop.xlane.xlu0 %331
    %v333 = vrcp.pop %v329
    %v334 = vrcp.pop %v332
    %v335 = vmul.f32 %v324, %v333
    %v336 = vmul.f32 %v326, %v334
    %337 = vrot.lane.b32.xlu0 %v146, 64
    %v338 = vpop.permute.xlu0 %337
    %v341 = vsel %vm161, %v335, 0
    %343 = vmatprep.subr.mxu0 0.0
    %344 = vmatpush1.msra.mxu0 0.0
    %345 = vmatprep.subr.mxu0 0.0
    %346 = vmatpush1.msra.mxu0 0.0
    %347 = vmatprep.subr.mxu0 0.0
    %348 = vmatpush1.msra.mxu0 0.0
    %349 = vmatprep.subr.mxu0 0.0
    %350 = vmatpush1.msra.mxu0 0.0
    %351 = vmatprep.subr.mxu0 0.0
    %352 = vmatpush1.msra.mxu0 0.0
    %353 = vmatprep.subr.mxu0 0.0
    %354 = vmatpush1.msra.mxu0 0.0
    %355 = vmatprep.subr.mxu0 0.0
    %356 = vmatpush1.msra.mxu0 0.0
    %357 = vmatprep.subr.mxu0 0.0
    %358 = vmatpush1.msra.mxu0 0.0
    %359 = vmatprep.subr.mxu0 0.0
    %360 = vmatpush1.msra.mxu0 0.0
    %361 = vmatprep.subr.mxu0 0.0
    %362 = vmatpush1.msra.mxu0 0.0
    %363 = vmatprep.subr.mxu0 0.0
    %364 = vmatpush1.msra.mxu0 0.0
    %365 = vmatprep.subr.mxu0 0.0
    %366 = vmatpush1.msra.mxu0 0.0
    %367 = vmatprep.subr.mxu0 0.0
    %368 = vmatpush1.msra.mxu0 0.0
    %369 = vmatprep.subr.mxu0 0.0
    %370 = vmatpush1.msra.mxu0 0.0
    %371 = vmatprep.subr.mxu0 0.0
    %372 = vmatpush1.msra.mxu0 0.0
    %373 = vmatprep.subr.mxu0 0.0
    %374 = vmatpush1.msra.mxu0 %v338
    %375 = vmatprep.subr.mxu0 0.0
    %376 = vmatpush2.msra.mxu0 0.0
    %377 = vmatprep.subr.mxu0 0.0
    %378 = vmatpush2.msra.mxu0 0.0
    %379 = vmatprep.subr.mxu0 0.0
    %380 = vmatpush2.msra.mxu0 0.0
    %381 = vmatprep.subr.mxu0 0.0
    %382 = vmatpush2.msra.mxu0 0.0
    %383 = vmatprep.subr.mxu0 0.0
    %384 = vmatpush2.msra.mxu0 0.0
    %385 = vmatprep.subr.mxu0 0.0
    %386 = vmatpush2.msra.mxu0 0.0
    %387 = vmatprep.subr.mxu0 0.0
    %388 = vmatpush2.msra.mxu0 0.0
    %389 = vmatprep.subr.mxu0 0.0
    %390 = vmatpush2.msra.mxu0 0.0
    %391 = vmatprep.subr.mxu0 0.0
    %392 = vmatpush2.msra.mxu0 0.0
    %393 = vmatprep.subr.mxu0 0.0
    %394 = vmatpush2.msra.mxu0 0.0
    %395 = vmatprep.subr.mxu0 0.0
    %396 = vmatpush2.msra.mxu0 0.0
    %397 = vmatprep.subr.mxu0 0.0
    %398 = vmatpush2.msra.mxu0 0.0
    %399 = vmatprep.subr.mxu0 0.0
    %400 = vmatpush2.msra.mxu0 0.0
    %401 = vmatprep.subr.mxu0 0.0
    %402 = vmatpush2.msra.mxu0 0.0
    %403 = vmatprep.subr.mxu0 0.0
    %404 = vmatpush2.msra.mxu0 0.0
    %405 = vmatprep.subr.mxu0 0.0
    %406 = vmatpush2.msra.mxu0 0.0
    %407 = vmatprep.mubr.f32.mxu0 0.0
    %408 = vmatmul.mubr.f32.gmra.mxu0 %v341
    %v409 = vpop.f32.mrf.mxu0
    %v410 = vadd.f32 0.0, %v409
    %v411 = vpop.f32.mrf.mxu0
    %412 = vdwg.mxu0
    %413 = vrot.lane.b32.xlu0 %v151, 64
    %v414 = vpop.permute.xlu0 %413
    %v417 = vsel %vm161, %v336, 0
    %419 = vmatprep.subr.mxu0 0.0
    %420 = vmatpush1.msra.mxu0 0.0
    %421 = vmatprep.subr.mxu0 0.0
    %422 = vmatpush1.msra.mxu0 0.0
    %423 = vmatprep.subr.mxu0 0.0
    %424 = vmatpush1.msra.mxu0 0.0
    %425 = vmatprep.subr.mxu0 0.0
    %426 = vmatpush1.msra.mxu0 0.0
    %427 = vmatprep.subr.mxu0 0.0
    %428 = vmatpush1.msra.mxu0 0.0
    %429 = vmatprep.subr.mxu0 0.0
    %430 = vmatpush1.msra.mxu0 0.0
    %431 = vmatprep.subr.mxu0 0.0
    %432 = vmatpush1.msra.mxu0 0.0
    %433 = vmatprep.subr.mxu0 0.0
    %434 = vmatpush1.msra.mxu0 0.0
    %435 = vmatprep.subr.mxu0 0.0
    %436 = vmatpush1.msra.mxu0 0.0
    %437 = vmatprep.subr.mxu0 0.0
    %438 = vmatpush1.msra.mxu0 0.0
    %439 = vmatprep.subr.mxu0 0.0
    %440 = vmatpush1.msra.mxu0 0.0
    %441 = vmatprep.subr.mxu0 0.0
    %442 = vmatpush1.msra.mxu0 0.0
    %443 = vmatprep.subr.mxu0 0.0
    %444 = vmatpush1.msra.mxu0 0.0
    %445 = vmatprep.subr.mxu0 0.0
    %446 = vmatpush1.msra.mxu0 0.0
    %447 = vmatprep.subr.mxu0 0.0
    %448 = vmatpush1.msra.mxu0 0.0
    %449 = vmatprep.subr.mxu0 0.0
    %450 = vmatpush1.msra.mxu0 %v414
    %451 = vmatprep.subr.mxu0 0.0
    %452 = vmatpush2.msra.mxu0 0.0
    %453 = vmatprep.subr.mxu0 0.0
    %454 = vmatpush2.msra.mxu0 0.0
    %455 = vmatprep.subr.mxu0 0.0
    %456 = vmatpush2.msra.mxu0 0.0
    %457 = vmatprep.subr.mxu0 0.0
    %458 = vmatpush2.msra.mxu0 0.0
    %459 = vmatprep.subr.mxu0 0.0
    %460 = vmatpush2.msra.mxu0 0.0
    %461 = vmatprep.subr.mxu0 0.0
    %462 = vmatpush2.msra.mxu0 0.0
    %463 = vmatprep.subr.mxu0 0.0
    %464 = vmatpush2.msra.mxu0 0.0
    %465 = vmatprep.subr.mxu0 0.0
    %466 = vmatpush2.msra.mxu0 0.0
    %467 = vmatprep.subr.mxu0 0.0
    %468 = vmatpush2.msra.mxu0 0.0
    %469 = vmatprep.subr.mxu0 0.0
    %470 = vmatpush2.msra.mxu0 0.0
    %471 = vmatprep.subr.mxu0 0.0
    %472 = vmatpush2.msra.mxu0 0.0
    %473 = vmatprep.subr.mxu0 0.0
    %474 = vmatpush2.msra.mxu0 0.0
    %475 = vmatprep.subr.mxu0 0.0
    %476 = vmatpush2.msra.mxu0 0.0
    %477 = vmatprep.subr.mxu0 0.0
    %478 = vmatpush2.msra.mxu0 0.0
    %479 = vmatprep.subr.mxu0 0.0
    %480 = vmatpush2.msra.mxu0 0.0
    %481 = vmatprep.subr.mxu0 0.0
    %482 = vmatpush2.msra.mxu0 0.0
    %483 = vmatprep.mubr.f32.mxu0 0.0
    %484 = vmatmul.mubr.f32.gmra.mxu0 %v417
    %v485 = vpop.f32.mrf.mxu0
    %v486 = vadd.f32 0.0, %v485
    %v487 = vpop.f32.mrf.mxu0
    %488 = vdwg.mxu0
    %489 = vrot.lane.b32.xlu0 %v146, 120
    %v490 = vpop.permute.xlu0 %489
    %491 = vrot.lane.b32.xlu0 %v146, 88
    %v492 = vpop.permute.xlu0 %491
    %v493 = vsel %vm161, %v490, 0
    %v495 = vsel %vm161, %v492, 0
    %497 = vmatprep.subr.mxu0 0.0
    %498 = vmatpush1.xpose.msra.mxu0 0.0
    %499 = vmatprep.subr.mxu0 0.0
    %500 = vmatpush1.xpose.msra.mxu0 0.0
    %501 = vmatprep.subr.mxu0 0.0
    %502 = vmatpush1.xpose.msra.mxu0 0.0
    %503 = vmatprep.subr.mxu0 0.0
    %504 = vmatpush1.xpose.msra.mxu0 0.0
    %505 = vmatprep.subr.mxu0 0.0
    %506 = vmatpush1.xpose.msra.mxu0 0.0
    %507 = vmatprep.subr.mxu0 0.0
    %508 = vmatpush1.xpose.msra.mxu0 0.0
    %509 = vmatprep.subr.mxu0 0.0
    %510 = vmatpush1.xpose.msra.mxu0 0.0
    %511 = vmatprep.subr.mxu0 0.0
    %512 = vmatpush1.xpose.msra.mxu0 0.0
    %513 = vmatprep.subr.mxu0 0.0
    %514 = vmatpush1.xpose.msra.mxu0 0.0
    %515 = vmatprep.subr.mxu0 0.0
    %516 = vmatpush1.xpose.msra.mxu0 0.0
    %517 = vmatprep.subr.mxu0 0.0
    %518 = vmatpush1.xpose.msra.mxu0 0.0
    %519 = vmatprep.subr.mxu0 0.0
    %520 = vmatpush1.xpose.msra.mxu0 0.0
    %521 = vmatprep.subr.mxu0 0.0
    %522 = vmatpush1.xpose.msra.mxu0 0.0
    %523 = vmatprep.subr.mxu0 0.0
    %524 = vmatpush1.xpose.msra.mxu0 0.0
    %525 = vmatprep.subr.mxu0 0.0
    %526 = vmatpush1.xpose.msra.mxu0 0.0
    %527 = vmatprep.subr.mxu0 0.0
    %528 = vmatpush1.xpose.msra.mxu0 %v495
    %529 = vmatprep.subr.mxu0 0.0
    %530 = vmatpush2.xpose.msra.mxu0 0.0
    %531 = vmatprep.subr.mxu0 0.0
    %532 = vmatpush2.xpose.msra.mxu0 0.0
    %533 = vmatprep.subr.mxu0 0.0
    %534 = vmatpush2.xpose.msra.mxu0 0.0
    %535 = vmatprep.subr.mxu0 0.0
    %536 = vmatpush2.xpose.msra.mxu0 0.0
    %537 = vmatprep.subr.mxu0 0.0
    %538 = vmatpush2.xpose.msra.mxu0 0.0
    %539 = vmatprep.subr.mxu0 0.0
    %540 = vmatpush2.xpose.msra.mxu0 0.0
    %541 = vmatprep.subr.mxu0 0.0
    %542 = vmatpush2.xpose.msra.mxu0 0.0
    %543 = vmatprep.subr.mxu0 0.0
    %544 = vmatpush2.xpose.msra.mxu0 0.0
    %545 = vmatprep.subr.mxu0 0.0
    %546 = vmatpush2.xpose.msra.mxu0 0.0
    %547 = vmatprep.subr.mxu0 0.0
    %548 = vmatpush2.xpose.msra.mxu0 0.0
    %549 = vmatprep.subr.mxu0 0.0
    %550 = vmatpush2.xpose.msra.mxu0 0.0
    %551 = vmatprep.subr.mxu0 0.0
    %552 = vmatpush2.xpose.msra.mxu0 0.0
    %553 = vmatprep.subr.mxu0 0.0
    %554 = vmatpush2.xpose.msra.mxu0 0.0
    %555 = vmatprep.subr.mxu0 0.0
    %556 = vmatpush2.xpose.msra.mxu0 0.0
    %557 = vmatprep.subr.mxu0 0.0
    %558 = vmatpush2.xpose.msra.mxu0 0.0
    %559 = vmatprep.subr.mxu0 0.0
    %560 = vmatpush2.xpose.msra.mxu0 0.0
    %561 = vmatprep.mubr.f32.mxu0 0.0
    %562 = vmatmul.mubr.f32.gmra.mxu0 %v493
    %v563 = vpop.f32.mrf.mxu0
    %v564 = vadd.f32 0.0, %v563
    %v565 = vpop.f32.mrf.mxu0
    %566 = vdwg.mxu0
    %567 = vrot.lane.b32.xlu0 %v151, 120
    %v568 = vpop.permute.xlu0 %567
    %569 = vrot.lane.b32.xlu0 %v151, 88
    %v570 = vpop.permute.xlu0 %569
    %v571 = vsel %vm161, %v568, 0
    %v573 = vsel %vm161, %v570, 0
    %575 = vmatprep.subr.mxu0 0.0
    %576 = vmatpush1.xpose.msra.mxu0 0.0
    %577 = vmatprep.subr.mxu0 0.0
    %578 = vmatpush1.xpose.msra.mxu0 0.0
    %579 = vmatprep.subr.mxu0 0.0
    %580 = vmatpush1.xpose.msra.mxu0 0.0
    %581 = vmatprep.subr.mxu0 0.0
    %582 = vmatpush1.xpose.msra.mxu0 0.0
    %583 = vmatprep.subr.mxu0 0.0
    %584 = vmatpush1.xpose.msra.mxu0 0.0
    %585 = vmatprep.subr.mxu0 0.0
    %586 = vmatpush1.xpose.msra.mxu0 0.0
    %587 = vmatprep.subr.mxu0 0.0
    %588 = vmatpush1.xpose.msra.mxu0 0.0
    %589 = vmatprep.subr.mxu0 0.0
    %590 = vmatpush1.xpose.msra.mxu0 0.0
    %591 = vmatprep.subr.mxu0 0.0
    %592 = vmatpush1.xpose.msra.mxu0 0.0
    %593 = vmatprep.subr.mxu0 0.0
    %594 = vmatpush1.xpose.msra.mxu0 0.0
    %595 = vmatprep.subr.mxu0 0.0
    %596 = vmatpush1.xpose.msra.mxu0 0.0
    %597 = vmatprep.subr.mxu0 0.0
    %598 = vmatpush1.xpose.msra.mxu0 0.0
    %599 = vmatprep.subr.mxu0 0.0
    %600 = vmatpush1.xpose.msra.mxu0 0.0
    %601 = vmatprep.subr.mxu0 0.0
    %602 = vmatpush1.xpose.msra.mxu0 0.0
    %603 = vmatprep.subr.mxu0 0.0
    %604 = vmatpush1.xpose.msra.mxu0 0.0
    %605 = vmatprep.subr.mxu0 0.0
    %606 = vmatpush1.xpose.msra.mxu0 %v573
    %607 = vmatprep.subr.mxu0 0.0
    %608 = vmatpush2.xpose.msra.mxu0 0.0
    %609 = vmatprep.subr.mxu0 0.0
    %610 = vmatpush2.xpose.msra.mxu0 0.0
    %611 = vmatprep.subr.mxu0 0.0
    %612 = vmatpush2.xpose.msra.mxu0 0.0
    %613 = vmatprep.subr.mxu0 0.0
    %614 = vmatpush2.xpose.msra.mxu0 0.0
    %615 = vmatprep.subr.mxu0 0.0
    %616 = vmatpush2.xpose.msra.mxu0 0.0
    %617 = vmatprep.subr.mxu0 0.0
    %618 = vmatpush2.xpose.msra.mxu0 0.0
    %619 = vmatprep.subr.mxu0 0.0
    %620 = vmatpush2.xpose.msra.mxu0 0.0
    %621 = vmatprep.subr.mxu0 0.0
    %622 = vmatpush2.xpose.msra.mxu0 0.0
    %623 = vmatprep.subr.mxu0 0.0
    %624 = vmatpush2.xpose.msra.mxu0 0.0
    %625 = vmatprep.subr.mxu0 0.0
    %626 = vmatpush2.xpose.msra.mxu0 0.0
    %627 = vmatprep.subr.mxu0 0.0
    %628 = vmatpush2.xpose.msra.mxu0 0.0
    %629 = vmatprep.subr.mxu0 0.0
    %630 = vmatpush2.xpose.msra.mxu0 0.0
    %631 = vmatprep.subr.mxu0 0.0
    %632 = vmatpush2.xpose.msra.mxu0 0.0
    %633 = vmatprep.subr.mxu0 0.0
    %634 = vmatpush2.xpose.msra.mxu0 0.0
    %635 = vmatprep.subr.mxu0 0.0
    %636 = vmatpush2.xpose.msra.mxu0 0.0
    %637 = vmatprep.subr.mxu0 0.0
    %638 = vmatpush2.xpose.msra.mxu0 0.0
    %639 = vmatprep.mubr.f32.mxu0 0.0
    %640 = vmatmul.mubr.f32.gmra.mxu0 %v571
    %v641 = vpop.f32.mrf.mxu0
    %v642 = vadd.f32 0.0, %v641
    %v643 = vpop.f32.mrf.mxu0
    %644 = vdwg.mxu0
    %v645 = vmul.f32 %v564, 0.35355338
    %v646 = vmul.f32 %v642, 0.35355338
    %v647 = vsel %vm161, %v645, -inf
    %648 = vmax.xlane.f32.xlu0 %v647
    %v649 = vpop.xlane.xlu0 %648
    %v650 = vsel %vm161, %v646, -inf
    %651 = vmax.xlane.f32.xlu0 %v650
    %v652 = vpop.xlane.xlu0 %651
    %v653 = vsub.f32 %v645, %v649
    %v654 = vsub.f32 %v646, %v652
    %v655 = vmul.f32 %v653, 1.442695
    %v656 = vpow.pop %v655
    %v657 = vmul.f32 %v654, 1.442695
    %v658 = vpow.pop %v657
    %v659 = vsel %vm161, %v656, 0.0
    %660 = vadd.xlane.f32.xlu0 %v659
    %v661 = vpop.xlane.xlu0 %660
    %v662 = vsel %vm161, %v658, 0.0
    %663 = vadd.xlane.f32.xlu0 %v662
    %v664 = vpop.xlane.xlu0 %663
    %v665 = vrcp.pop %v661
    %v666 = vrcp.pop %v664
    %v667 = vmul.f32 %v656, %v665
    %v668 = vmul.f32 %v658, %v666
    %669 = vrot.lane.b32.xlu0 %v146, 56
    %v670 = vpop.permute.xlu0 %669
    %v673 = vsel %vm161, %v667, 0
    %675 = vmatprep.subr.mxu0 0.0
    %676 = vmatpush1.msra.mxu0 0.0
    %677 = vmatprep.subr.mxu0 0.0
    %678 = vmatpush1.msra.mxu0 0.0
    %679 = vmatprep.subr.mxu0 0.0
    %680 = vmatpush1.msra.mxu0 0.0
    %681 = vmatprep.subr.mxu0 0.0
    %682 = vmatpush1.msra.mxu0 0.0
    %683 = vmatprep.subr.mxu0 0.0
    %684 = vmatpush1.msra.mxu0 0.0
    %685 = vmatprep.subr.mxu0 0.0
    %686 = vmatpush1.msra.mxu0 0.0
    %687 = vmatprep.subr.mxu0 0.0
    %688 = vmatpush1.msra.mxu0 0.0
    %689 = vmatprep.subr.mxu0 0.0
    %690 = vmatpush1.msra.mxu0 0.0
    %691 = vmatprep.subr.mxu0 0.0
    %692 = vmatpush1.msra.mxu0 0.0
    %693 = vmatprep.subr.mxu0 0.0
    %694 = vmatpush1.msra.mxu0 0.0
    %695 = vmatprep.subr.mxu0 0.0
    %696 = vmatpush1.msra.mxu0 0.0
    %697 = vmatprep.subr.mxu0 0.0
    %698 = vmatpush1.msra.mxu0 0.0
    %699 = vmatprep.subr.mxu0 0.0
    %700 = vmatpush1.msra.mxu0 0.0
    %701 = vmatprep.subr.mxu0 0.0
    %702 = vmatpush1.msra.mxu0 0.0
    %703 = vmatprep.subr.mxu0 0.0
    %704 = vmatpush1.msra.mxu0 0.0
    %705 = vmatprep.subr.mxu0 0.0
    %706 = vmatpush1.msra.mxu0 %v670
    %707 = vmatprep.subr.mxu0 0.0
    %708 = vmatpush2.msra.mxu0 0.0
    %709 = vmatprep.subr.mxu0 0.0
    %710 = vmatpush2.msra.mxu0 0.0
    %711 = vmatprep.subr.mxu0 0.0
    %712 = vmatpush2.msra.mxu0 0.0
    %713 = vmatprep.subr.mxu0 0.0
    %714 = vmatpush2.msra.mxu0 0.0
    %715 = vmatprep.subr.mxu0 0.0
    %716 = vmatpush2.msra.mxu0 0.0
    %717 = vmatprep.subr.mxu0 0.0
    %718 = vmatpush2.msra.mxu0 0.0
    %719 = vmatprep.subr.mxu0 0.0
    %720 = vmatpush2.msra.mxu0 0.0
    %721 = vmatprep.subr.mxu0 0.0
    %722 = vmatpush2.msra.mxu0 0.0
    %723 = vmatprep.subr.mxu0 0.0
    %724 = vmatpush2.msra.mxu0 0.0
    %725 = vmatprep.subr.mxu0 0.0
    %726 = vmatpush2.msra.mxu0 0.0
    %727 = vmatprep.subr.mxu0 0.0
    %728 = vmatpush2.msra.mxu0 0.0
    %729 = vmatprep.subr.mxu0 0.0
    %730 = vmatpush2.msra.mxu0 0.0
    %731 = vmatprep.subr.mxu0 0.0
    %732 = vmatpush2.msra.mxu0 0.0
    %733 = vmatprep.subr.mxu0 0.0
    %734 = vmatpush2.msra.mxu0 0.0
    %735 = vmatprep.subr.mxu0 0.0
    %736 = vmatpush2.msra.mxu0 0.0
    %737 = vmatprep.subr.mxu0 0.0
    %738 = vmatpush2.msra.mxu0 0.0
    %739 = vmatprep.mubr.f32.mxu0 0.0
    %740 = vmatmul.mubr.f32.gmra.mxu0 %v673
    %v741 = vpop.f32.mrf.mxu0
    %v742 = vadd.f32 0.0, %v741
    %v743 = vpop.f32.mrf.mxu0
    %744 = vdwg.mxu0
    %745 = vrot.lane.b32.xlu0 %v151, 56
    %v746 = vpop.permute.xlu0 %745
    %v749 = vsel %vm161, %v668, 0
    %751 = vmatprep.subr.mxu0 0.0
    %752 = vmatpush1.msra.mxu0 0.0
    %753 = vmatprep.subr.mxu0 0.0
    %754 = vmatpush1.msra.mxu0 0.0
    %755 = vmatprep.subr.mxu0 0.0
    %756 = vmatpush1.msra.mxu0 0.0
    %757 = vmatprep.subr.mxu0 0.0
    %758 = vmatpush1.msra.mxu0 0.0
    %759 = vmatprep.subr.mxu0 0.0
    %760 = vmatpush1.msra.mxu0 0.0
    %761 = vmatprep.subr.mxu0 0.0
    %762 = vmatpush1.msra.mxu0 0.0
    %763 = vmatprep.subr.mxu0 0.0
    %764 = vmatpush1.msra.mxu0 0.0
    %765 = vmatprep.subr.mxu0 0.0
    %766 = vmatpush1.msra.mxu0 0.0
    %767 = vmatprep.subr.mxu0 0.0
    %768 = vmatpush1.msra.mxu0 0.0
    %769 = vmatprep.subr.mxu0 0.0
    %770 = vmatpush1.msra.mxu0 0.0
    %771 = vmatprep.subr.mxu0 0.0
    %772 = vmatpush1.msra.mxu0 0.0
    %773 = vmatprep.subr.mxu0 0.0
    %774 = vmatpush1.msra.mxu0 0.0
    %775 = vmatprep.subr.mxu0 0.0
    %776 = vmatpush1.msra.mxu0 0.0
    %777 = vmatprep.subr.mxu0 0.0
    %778 = vmatpush1.msra.mxu0 0.0
    %779 = vmatprep.subr.mxu0 0.0
    %780 = vmatpush1.msra.mxu0 0.0
    %781 = vmatprep.subr.mxu0 0.0
    %782 = vmatpush1.msra.mxu0 %v746
    %783 = vmatprep.subr.mxu0 0.0
    %784 = vmatpush2.msra.mxu0 0.0
    %785 = vmatprep.subr.mxu0 0.0
    %786 = vmatpush2.msra.mxu0 0.0
    %787 = vmatprep.subr.mxu0 0.0
    %788 = vmatpush2.msra.mxu0 0.0
    %789 = vmatprep.subr.mxu0 0.0
    %790 = vmatpush2.msra.mxu0 0.0
    %791 = vmatprep.subr.mxu0 0.0
    %792 = vmatpush2.msra.mxu0 0.0
    %793 = vmatprep.subr.mxu0 0.0
    %794 = vmatpush2.msra.mxu0 0.0
    %795 = vmatprep.subr.mxu0 0.0
    %796 = vmatpush2.msra.mxu0 0.0
    %797 = vmatprep.subr.mxu0 0.0
    %798 = vmatpush2.msra.mxu0 0.0
    %799 = vmatprep.subr.mxu0 0.0
    %800 = vmatpush2.msra.mxu0 0.0
    %801 = vmatprep.subr.mxu0 0.0
    %802 = vmatpush2.msra.mxu0 0.0
    %803 = vmatprep.subr.mxu0 0.0
    %804 = vmatpush2.msra.mxu0 0.0
    %805 = vmatprep.subr.mxu0 0.0
    %806 = vmatpush2.msra.mxu0 0.0
    %807 = vmatprep.subr.mxu0 0.0
    %808 = vmatpush2.msra.mxu0 0.0
    %809 = vmatprep.subr.mxu0 0.0
    %810 = vmatpush2.msra.mxu0 0.0
    %811 = vmatprep.subr.mxu0 0.0
    %812 = vmatpush2.msra.mxu0 0.0
    %813 = vmatprep.subr.mxu0 0.0
    %814 = vmatpush2.msra.mxu0 0.0
    %815 = vmatprep.mubr.f32.mxu0 0.0
    %816 = vmatmul.mubr.f32.gmra.mxu0 %v749
    %v817 = vpop.f32.mrf.mxu0
    %v818 = vadd.f32 0.0, %v817
    %v819 = vpop.f32.mrf.mxu0
    %820 = vdwg.mxu0
    %v822 = vsel %vm161, %v742, 0
    %v825 = vsel %vm161, %v818, 0
    %827 = vmatprep.subr.mxu0 0.0
    %828 = vmatpush1.msra.mxu0 0.0
    %829 = vmatprep.subr.mxu0 0.0
    %830 = vmatpush1.msra.mxu0 0.0
    %831 = vmatprep.subr.mxu0 0.0
    %832 = vmatpush1.msra.mxu0 0.0
    %833 = vmatprep.subr.mxu0 0.0
    %834 = vmatpush1.msra.mxu0 0.0
    %835 = vmatprep.subr.mxu0 0.0
    %836 = vmatpush1.msra.mxu0 0.0
    %837 = vmatprep.subr.mxu0 0.0
    %838 = vmatpush1.msra.mxu0 0.0
    %839 = vmatprep.subr.mxu0 0.0
    %840 = vmatpush1.msra.mxu0 0.0
    %841 = vmatprep.subr.mxu0 0.0
    %842 = vmatpush1.msra.mxu0 0.0
    %843 = vmatprep.subr.mxu0 0.0
    %844 = vmatpush1.msra.mxu0 0.0
    %845 = vmatprep.subr.mxu0 0.0
    %846 = vmatpush1.msra.mxu0 0.0
    %847 = vmatprep.subr.mxu0 0.0
    %848 = vmatpush1.msra.mxu0 0.0
    %849 = vmatprep.subr.mxu0 0.0
    %850 = vmatpush1.msra.mxu0 0.0
    %851 = vmatprep.subr.mxu0 0.0
    %852 = vmatpush1.msra.mxu0 0.0
    %853 = vmatprep.subr.mxu0 0.0
    %854 = vmatpush1.msra.mxu0 0.0
    %855 = vmatprep.subr.mxu0 0.0
    %856 = vmatpush1.msra.mxu0 0.0
    %857 = vmatprep.subr.mxu0 0.0
    %858 = vmatpush1.msra.mxu0 %v155
    %859 = vmatprep.subr.mxu0 0.0
    %860 = vmatpush2.msra.mxu0 0.0
    %861 = vmatprep.subr.mxu0 0.0
    %862 = vmatpush2.msra.mxu0 0.0
    %863 = vmatprep.subr.mxu0 0.0
    %864 = vmatpush2.msra.mxu0 0.0
    %865 = vmatprep.subr.mxu0 0.0
    %866 = vmatpush2.msra.mxu0 0.0
    %867 = vmatprep.subr.mxu0 0.0
    %868 = vmatpush2.msra.mxu0 0.0
    %869 = vmatprep.subr.mxu0 0.0
    %870 = vmatpush2.msra.mxu0 0.0
    %871 = vmatprep.subr.mxu0 0.0
    %872 = vmatpush2.msra.mxu0 0.0
    %873 = vmatprep.subr.mxu0 0.0
    %874 = vmatpush2.msra.mxu0 0.0
    %875 = vmatprep.subr.mxu0 0.0
    %876 = vmatpush2.msra.mxu0 0.0
    %877 = vmatprep.subr.mxu0 0.0
    %878 = vmatpush2.msra.mxu0 0.0
    %879 = vmatprep.subr.mxu0 0.0
    %880 = vmatpush2.msra.mxu0 0.0
    %881 = vmatprep.subr.mxu0 0.0
    %882 = vmatpush2.msra.mxu0 0.0
    %883 = vmatprep.subr.mxu0 0.0
    %884 = vmatpush2.msra.mxu0 0.0
    %885 = vmatprep.subr.mxu0 0.0
    %886 = vmatpush2.msra.mxu0 0.0
    %887 = vmatprep.subr.mxu0 0.0
    %888 = vmatpush2.msra.mxu0 0.0
    %889 = vmatprep.subr.mxu0 0.0
    %890 = vmatpush2.msra.mxu0 0.0
    %891 = vmatprep.mubr.f32.mxu0 0.0
    %892 = vmatmul.mubr.f32.gmra.mxu0 %v822
    %v893 = vpop.f32.mrf.mxu0
    %v894 = vadd.f32 0.0, %v893
    %v895 = vpop.f32.mrf.mxu0
    %896 = vmatprep.mubr.f32.mxu0 0.0
    %897 = vmatmul.mubr.f32.gmra.mxu0 %v825
    %v898 = vpop.f32.mrf.mxu0
    %v899 = vadd.f32 0.0, %v898
    %v900 = vpop.f32.mrf.mxu0
    %901 = vdwg.mxu0
    %v903 = vsel %vm161, %v410, 0
    %v906 = vsel %vm161, %v486, 0
    %908 = vmatprep.subr.mxu0 0.0
    %909 = vmatpush1.msra.mxu0 0.0
    %910 = vmatprep.subr.mxu0 0.0
    %911 = vmatpush1.msra.mxu0 0.0
    %912 = vmatprep.subr.mxu0 0.0
    %913 = vmatpush1.msra.mxu0 0.0
    %914 = vmatprep.subr.mxu0 0.0
    %915 = vmatpush1.msra.mxu0 0.0
    %916 = vmatprep.subr.mxu0 0.0
    %917 = vmatpush1.msra.mxu0 0.0
    %918 = vmatprep.subr.mxu0 0.0
    %919 = vmatpush1.msra.mxu0 0.0
    %920 = vmatprep.subr.mxu0 0.0
    %921 = vmatpush1.msra.mxu0 0.0
    %922 = vmatprep.subr.mxu0 0.0
    %923 = vmatpush1.msra.mxu0 0.0
    %924 = vmatprep.subr.mxu0 0.0
    %925 = vmatpush1.msra.mxu0 0.0
    %926 = vmatprep.subr.mxu0 0.0
    %927 = vmatpush1.msra.mxu0 0.0
    %928 = vmatprep.subr.mxu0 0.0
    %929 = vmatpush1.msra.mxu0 0.0
    %930 = vmatprep.subr.mxu0 0.0
    %931 = vmatpush1.msra.mxu0 0.0
    %932 = vmatprep.subr.mxu0 0.0
    %933 = vmatpush1.msra.mxu0 0.0
    %934 = vmatprep.subr.mxu0 0.0
    %935 = vmatpush1.msra.mxu0 0.0
    %936 = vmatprep.subr.mxu0 0.0
    %937 = vmatpush1.msra.mxu0 0.0
    %938 = vmatprep.subr.mxu0 0.0
    %939 = vmatpush1.msra.mxu0 %v154
    %940 = vmatprep.subr.mxu0 0.0
    %941 = vmatpush2.msra.mxu0 0.0
    %942 = vmatprep.subr.mxu0 0.0
    %943 = vmatpush2.msra.mxu0 0.0
    %944 = vmatprep.subr.mxu0 0.0
    %945 = vmatpush2.msra.mxu0 0.0
    %946 = vmatprep.subr.mxu0 0.0
    %947 = vmatpush2.msra.mxu0 0.0
    %948 = vmatprep.subr.mxu0 0.0
    %949 = vmatpush2.msra.mxu0 0.0
    %950 = vmatprep.subr.mxu0 0.0
    %951 = vmatpush2.msra.mxu0 0.0
    %952 = vmatprep.subr.mxu0 0.0
    %953 = vmatpush2.msra.mxu0 0.0
    %954 = vmatprep.subr.mxu0 0.0
    %955 = vmatpush2.msra.mxu0 0.0
    %956 = vmatprep.subr.mxu0 0.0
    %957 = vmatpush2.msra.mxu0 0.0
    %958 = vmatprep.subr.mxu0 0.0
    %959 = vmatpush2.msra.mxu0 0.0
    %960 = vmatprep.subr.mxu0 0.0
    %961 = vmatpush2.msra.mxu0 0.0
    %962 = vmatprep.subr.mxu0 0.0
    %963 = vmatpush2.msra.mxu0 0.0
    %964 = vmatprep.subr.mxu0 0.0
    %965 = vmatpush2.msra.mxu0 0.0
    %966 = vmatprep.subr.mxu0 0.0
    %967 = vmatpush2.msra.mxu0 0.0
    %968 = vmatprep.subr.mxu0 0.0
    %969 = vmatpush2.msra.mxu0 0.0
    %970 = vmatprep.subr.mxu0 0.0
    %971 = vmatpush2.msra.mxu0 0.0
    %972 = vmatprep.mubr.f32.mxu0 0.0
    %973 = vmatmul.mubr.f32.gmra.mxu0 %v903
    %v974 = vpop.f32.mrf.mxu0
    %v975 = vadd.f32 %v894, %v974
    %v976 = vpop.f32.mrf.mxu0
    %977 = vmatprep.mubr.f32.mxu0 0.0
    %978 = vmatmul.mubr.f32.gmra.mxu0 %v906
    %v979 = vpop.f32.mrf.mxu0
    %v980 = vadd.f32 %v899, %v979
    %v981 = vpop.f32.mrf.mxu0
    %982 = vdwg.mxu0
    %983 = vrot.lane.b32.xlu0 %v146, 112
    %v984 = vpop.permute.xlu0 %983
    %985 = vrot.lane.b32.xlu0 %v146, 80
    %v986 = vpop.permute.xlu0 %985
    %v987 = vsel %vm161, %v984, 0
    %v989 = vsel %vm161, %v986, 0
    %991 = vmatprep.subr.mxu0 0.0
    %992 = vmatpush1.xpose.msra.mxu0 0.0
    %993 = vmatprep.subr.mxu0 0.0
    %994 = vmatpush1.xpose.msra.mxu0 0.0
    %995 = vmatprep.subr.mxu0 0.0
    %996 = vmatpush1.xpose.msra.mxu0 0.0
    %997 = vmatprep.subr.mxu0 0.0
    %998 = vmatpush1.xpose.msra.mxu0 0.0
    %999 = vmatprep.subr.mxu0 0.0
    %1000 = vmatpush1.xpose.msra.mxu0 0.0
    %1001 = vmatprep.subr.mxu0 0.0
    %1002 = vmatpush1.xpose.msra.mxu0 0.0
    %1003 = vmatprep.subr.mxu0 0.0
    %1004 = vmatpush1.xpose.msra.mxu0 0.0
    %1005 = vmatprep.subr.mxu0 0.0
    %1006 = vmatpush1.xpose.msra.mxu0 0.0
    %1007 = vmatprep.subr.mxu0 0.0
    %1008 = vmatpush1.xpose.msra.mxu0 0.0
    %1009 = vmatprep.subr.mxu0 0.0
    %1010 = vmatpush1.xpose.msra.mxu0 0.0
    %1011 = vmatprep.subr.mxu0 0.0
    %1012 = vmatpush1.xpose.msra.mxu0 0.0
    %1013 = vmatprep.subr.mxu0 0.0
    %1014 = vmatpush1.xpose.msra.mxu0 0.0
    %1015 = vmatprep.subr.mxu0 0.0
    %1016 = vmatpush1.xpose.msra.mxu0 0.0
    %1017 = vmatprep.subr.mxu0 0.0
    %1018 = vmatpush1.xpose.msra.mxu0 0.0
    %1019 = vmatprep.subr.mxu0 0.0
    %1020 = vmatpush1.xpose.msra.mxu0 0.0
    %1021 = vmatprep.subr.mxu0 0.0
    %1022 = vmatpush1.xpose.msra.mxu0 %v989
    %1023 = vmatprep.subr.mxu0 0.0
    %1024 = vmatpush2.xpose.msra.mxu0 0.0
    %1025 = vmatprep.subr.mxu0 0.0
    %1026 = vmatpush2.xpose.msra.mxu0 0.0
    %1027 = vmatprep.subr.mxu0 0.0
    %1028 = vmatpush2.xpose.msra.mxu0 0.0
    %1029 = vmatprep.subr.mxu0 0.0
    %1030 = vmatpush2.xpose.msra.mxu0 0.0
    %1031 = vmatprep.subr.mxu0 0.0
    %1032 = vmatpush2.xpose.msra.mxu0 0.0
    %1033 = vmatprep.subr.mxu0 0.0
    %1034 = vmatpush2.xpose.msra.mxu0 0.0
    %1035 = vmatprep.subr.mxu0 0.0
    %1036 = vmatpush2.xpose.msra.mxu0 0.0
    %1037 = vmatprep.subr.mxu0 0.0
    %1038 = vmatpush2.xpose.msra.mxu0 0.0
    %1039 = vmatprep.subr.mxu0 0.0
    %1040 = vmatpush2.xpose.msra.mxu0 0.0
    %1041 = vmatprep.subr.mxu0 0.0
    %1042 = vmatpush2.xpose.msra.mxu0 0.0
    %1043 = vmatprep.subr.mxu0 0.0
    %1044 = vmatpush2.xpose.msra.mxu0 0.0
    %1045 = vmatprep.subr.mxu0 0.0
    %1046 = vmatpush2.xpose.msra.mxu0 0.0
    %1047 = vmatprep.subr.mxu0 0.0
    %1048 = vmatpush2.xpose.msra.mxu0 0.0
    %1049 = vmatprep.subr.mxu0 0.0
    %1050 = vmatpush2.xpose.msra.mxu0 0.0
    %1051 = vmatprep.subr.mxu0 0.0
    %1052 = vmatpush2.xpose.msra.mxu0 0.0
    %1053 = vmatprep.subr.mxu0 0.0
    %1054 = vmatpush2.xpose.msra.mxu0 0.0
    %1055 = vmatprep.mubr.f32.mxu0 0.0
    %1056 = vmatmul.mubr.f32.gmra.mxu0 %v987
    %v1057 = vpop.f32.mrf.mxu0
    %v1058 = vadd.f32 0.0, %v1057
    %v1059 = vpop.f32.mrf.mxu0
    %1060 = vdwg.mxu0
    %1061 = vrot.lane.b32.xlu0 %v151, 112
    %v1062 = vpop.permute.xlu0 %1061
    %1063 = vrot.lane.b32.xlu0 %v151, 80
    %v1064 = vpop.permute.xlu0 %1063
    %v1065 = vsel %vm161, %v1062, 0
    %v1067 = vsel %vm161, %v1064, 0
    %1069 = vmatprep.subr.mxu0 0.0
    %1070 = vmatpush1.xpose.msra.mxu0 0.0
    %1071 = vmatprep.subr.mxu0 0.0
    %1072 = vmatpush1.xpose.msra.mxu0 0.0
    %1073 = vmatprep.subr.mxu0 0.0
    %1074 = vmatpush1.xpose.msra.mxu0 0.0
    %1075 = vmatprep.subr.mxu0 0.0
    %1076 = vmatpush1.xpose.msra.mxu0 0.0
    %1077 = vmatprep.subr.mxu0 0.0
    %1078 = vmatpush1.xpose.msra.mxu0 0.0
    %1079 = vmatprep.subr.mxu0 0.0
    %1080 = vmatpush1.xpose.msra.mxu0 0.0
    %1081 = vmatprep.subr.mxu0 0.0
    %1082 = vmatpush1.xpose.msra.mxu0 0.0
    %1083 = vmatprep.subr.mxu0 0.0
    %1084 = vmatpush1.xpose.msra.mxu0 0.0
    %1085 = vmatprep.subr.mxu0 0.0
    %1086 = vmatpush1.xpose.msra.mxu0 0.0
    %1087 = vmatprep.subr.mxu0 0.0
    %1088 = vmatpush1.xpose.msra.mxu0 0.0
    %1089 = vmatprep.subr.mxu0 0.0
    %1090 = vmatpush1.xpose.msra.mxu0 0.0
    %1091 = vmatprep.subr.mxu0 0.0
    %1092 = vmatpush1.xpose.msra.mxu0 0.0
    %1093 = vmatprep.subr.mxu0 0.0
    %1094 = vmatpush1.xpose.msra.mxu0 0.0
    %1095 = vmatprep.subr.mxu0 0.0
    %1096 = vmatpush1.xpose.msra.mxu0 0.0
    %1097 = vmatprep.subr.mxu0 0.0
    %1098 = vmatpush1.xpose.msra.mxu0 0.0
    %1099 = vmatprep.subr.mxu0 0.0
    %1100 = vmatpush1.xpose.msra.mxu0 %v1067
    %1101 = vmatprep.subr.mxu0 0.0
    %1102 = vmatpush2.xpose.msra.mxu0 0.0
    %1103 = vmatprep.subr.mxu0 0.0
    %1104 = vmatpush2.xpose.msra.mxu0 0.0
    %1105 = vmatprep.subr.mxu0 0.0
    %1106 = vmatpush2.xpose.msra.mxu0 0.0
    %1107 = vmatprep.subr.mxu0 0.0
    %1108 = vmatpush2.xpose.msra.mxu0 0.0
    %1109 = vmatprep.subr.mxu0 0.0
    %1110 = vmatpush2.xpose.msra.mxu0 0.0
    %1111 = vmatprep.subr.mxu0 0.0
    %1112 = vmatpush2.xpose.msra.mxu0 0.0
    %1113 = vmatprep.subr.mxu0 0.0
    %1114 = vmatpush2.xpose.msra.mxu0 0.0
    %1115 = vmatprep.subr.mxu0 0.0
    %1116 = vmatpush2.xpose.msra.mxu0 0.0
    %1117 = vmatprep.subr.mxu0 0.0
    %1118 = vmatpush2.xpose.msra.mxu0 0.0
    %1119 = vmatprep.subr.mxu0 0.0
    %1120 = vmatpush2.xpose.msra.mxu0 0.0
    %1121 = vmatprep.subr.mxu0 0.0
    %1122 = vmatpush2.xpose.msra.mxu0 0.0
    %1123 = vmatprep.subr.mxu0 0.0
    %1124 = vmatpush2.xpose.msra.mxu0 0.0
    %1125 = vmatprep.subr.mxu0 0.0
    %1126 = vmatpush2.xpose.msra.mxu0 0.0
    %1127 = vmatprep.subr.mxu0 0.0
    %1128 = vmatpush2.xpose.msra.mxu0 0.0
    %1129 = vmatprep.subr.mxu0 0.0
    %1130 = vmatpush2.xpose.msra.mxu0 0.0
    %1131 = vmatprep.subr.mxu0 0.0
    %1132 = vmatpush2.xpose.msra.mxu0 0.0
    %1133 = vmatprep.mubr.f32.mxu0 0.0
    %1134 = vmatmul.mubr.f32.gmra.mxu0 %v1065
    %v1135 = vpop.f32.mrf.mxu0
    %v1136 = vadd.f32 0.0, %v1135
    %v1137 = vpop.f32.mrf.mxu0
    %1138 = vdwg.mxu0
    %v1139 = vmul.f32 %v1058, 0.35355338
    %v1140 = vmul.f32 %v1136, 0.35355338
    %v1141 = vsel %vm161, %v1139, -inf
    %1142 = vmax.xlane.f32.xlu0 %v1141
    %v1143 = vpop.xlane.xlu0 %1142
    %v1144 = vsel %vm161, %v1140, -inf
    %1145 = vmax.xlane.f32.xlu0 %v1144
    %v1146 = vpop.xlane.xlu0 %1145
    %v1147 = vsub.f32 %v1139, %v1143
    %v1148 = vsub.f32 %v1140, %v1146
    %v1149 = vmul.f32 %v1147, 1.442695
    %v1150 = vpow.pop %v1149
    %v1151 = vmul.f32 %v1148, 1.442695
    %v1152 = vpow.pop %v1151
    %v1153 = vsel %vm161, %v1150, 0.0
    %1154 = vadd.xlane.f32.xlu0 %v1153
    %v1155 = vpop.xlane.xlu0 %1154
    %v1156 = vsel %vm161, %v1152, 0.0
    %1157 = vadd.xlane.f32.xlu0 %v1156
    %v1158 = vpop.xlane.xlu0 %1157
    %v1159 = vrcp.pop %v1155
    %v1160 = vrcp.pop %v1158
    %v1161 = vmul.f32 %v1150, %v1159
    %v1162 = vmul.f32 %v1152, %v1160
    %1163 = vrot.lane.b32.xlu0 %v146, 48
    %v1164 = vpop.permute.xlu0 %1163
    %v1167 = vsel %vm161, %v1161, 0
    %1169 = vmatprep.subr.mxu0 0.0
    %1170 = vmatpush1.msra.mxu0 0.0
    %1171 = vmatprep.subr.mxu0 0.0
    %1172 = vmatpush1.msra.mxu0 0.0
    %1173 = vmatprep.subr.mxu0 0.0
    %1174 = vmatpush1.msra.mxu0 0.0
    %1175 = vmatprep.subr.mxu0 0.0
    %1176 = vmatpush1.msra.mxu0 0.0
    %1177 = vmatprep.subr.mxu0 0.0
    %1178 = vmatpush1.msra.mxu0 0.0
    %1179 = vmatprep.subr.mxu0 0.0
    %1180 = vmatpush1.msra.mxu0 0.0
    %1181 = vmatprep.subr.mxu0 0.0
    %1182 = vmatpush1.msra.mxu0 0.0
    %1183 = vmatprep.subr.mxu0 0.0
    %1184 = vmatpush1.msra.mxu0 0.0
    %1185 = vmatprep.subr.mxu0 0.0
    %1186 = vmatpush1.msra.mxu0 0.0
    %1187 = vmatprep.subr.mxu0 0.0
    %1188 = vmatpush1.msra.mxu0 0.0
    %1189 = vmatprep.subr.mxu0 0.0
    %1190 = vmatpush1.msra.mxu0 0.0
    %1191 = vmatprep.subr.mxu0 0.0
    %1192 = vmatpush1.msra.mxu0 0.0
    %1193 = vmatprep.subr.mxu0 0.0
    %1194 = vmatpush1.msra.mxu0 0.0
    %1195 = vmatprep.subr.mxu0 0.0
    %1196 = vmatpush1.msra.mxu0 0.0
    %1197 = vmatprep.subr.mxu0 0.0
    %1198 = vmatpush1.msra.mxu0 0.0
    %1199 = vmatprep.subr.mxu0 0.0
    %1200 = vmatpush1.msra.mxu0 %v1164
    %1201 = vmatprep.subr.mxu0 0.0
    %1202 = vmatpush2.msra.mxu0 0.0
    %1203 = vmatprep.subr.mxu0 0.0
    %1204 = vmatpush2.msra.mxu0 0.0
    %1205 = vmatprep.subr.mxu0 0.0
    %1206 = vmatpush2.msra.mxu0 0.0
    %1207 = vmatprep.subr.mxu0 0.0
    %1208 = vmatpush2.msra.mxu0 0.0
    %1209 = vmatprep.subr.mxu0 0.0
    %1210 = vmatpush2.msra.mxu0 0.0
    %1211 = vmatprep.subr.mxu0 0.0
    %1212 = vmatpush2.msra.mxu0 0.0
    %1213 = vmatprep.subr.mxu0 0.0
    %1214 = vmatpush2.msra.mxu0 0.0
    %1215 = vmatprep.subr.mxu0 0.0
    %1216 = vmatpush2.msra.mxu0 0.0
    %1217 = vmatprep.subr.mxu0 0.0
    %1218 = vmatpush2.msra.mxu0 0.0
    %1219 = vmatprep.subr.mxu0 0.0
    %1220 = vmatpush2.msra.mxu0 0.0
    %1221 = vmatprep.subr.mxu0 0.0
    %1222 = vmatpush2.msra.mxu0 0.0
    %1223 = vmatprep.subr.mxu0 0.0
    %1224 = vmatpush2.msra.mxu0 0.0
    %1225 = vmatprep.subr.mxu0 0.0
    %1226 = vmatpush2.msra.mxu0 0.0
    %1227 = vmatprep.subr.mxu0 0.0
    %1228 = vmatpush2.msra.mxu0 0.0
    %1229 = vmatprep.subr.mxu0 0.0
    %1230 = vmatpush2.msra.mxu0 0.0
    %1231 = vmatprep.subr.mxu0 0.0
    %1232 = vmatpush2.msra.mxu0 0.0
    %1233 = vmatprep.mubr.f32.mxu0 0.0
    %1234 = vmatmul.mubr.f32.gmra.mxu0 %v1167
    %v1235 = vpop.f32.mrf.mxu0
    %v1236 = vadd.f32 0.0, %v1235
    %v1237 = vpop.f32.mrf.mxu0
    %1238 = vdwg.mxu0
    %1239 = vrot.lane.b32.xlu0 %v151, 48
    %v1240 = vpop.permute.xlu0 %1239
    %v1243 = vsel %vm161, %v1162, 0
    %1245 = vmatprep.subr.mxu0 0.0
    %1246 = vmatpush1.msra.mxu0 0.0
    %1247 = vmatprep.subr.mxu0 0.0
    %1248 = vmatpush1.msra.mxu0 0.0
    %1249 = vmatprep.subr.mxu0 0.0
    %1250 = vmatpush1.msra.mxu0 0.0
    %1251 = vmatprep.subr.mxu0 0.0
    %1252 = vmatpush1.msra.mxu0 0.0
    %1253 = vmatprep.subr.mxu0 0.0
    %1254 = vmatpush1.msra.mxu0 0.0
    %1255 = vmatprep.subr.mxu0 0.0
    %1256 = vmatpush1.msra.mxu0 0.0
    %1257 = vmatprep.subr.mxu0 0.0
    %1258 = vmatpush1.msra.mxu0 0.0
    %1259 = vmatprep.subr.mxu0 0.0
    %1260 = vmatpush1.msra.mxu0 0.0
    %1261 = vmatprep.subr.mxu0 0.0
    %1262 = vmatpush1.msra.mxu0 0.0
    %1263 = vmatprep.subr.mxu0 0.0
    %1264 = vmatpush1.msra.mxu0 0.0
    %1265 = vmatprep.subr.mxu0 0.0
    %1266 = vmatpush1.msra.mxu0 0.0
    %1267 = vmatprep.subr.mxu0 0.0
    %1268 = vmatpush1.msra.mxu0 0.0
    %1269 = vmatprep.subr.mxu0 0.0
    %1270 = vmatpush1.msra.mxu0 0.0
    %1271 = vmatprep.subr.mxu0 0.0
    %1272 = vmatpush1.msra.mxu0 0.0
    %1273 = vmatprep.subr.mxu0 0.0
    %1274 = vmatpush1.msra.mxu0 0.0
    %1275 = vmatprep.subr.mxu0 0.0
    %1276 = vmatpush1.msra.mxu0 %v1240
    %1277 = vmatprep.subr.mxu0 0.0
    %1278 = vmatpush2.msra.mxu0 0.0
    %1279 = vmatprep.subr.mxu0 0.0
    %1280 = vmatpush2.msra.mxu0 0.0
    %1281 = vmatprep.subr.mxu0 0.0
    %1282 = vmatpush2.msra.mxu0 0.0
    %1283 = vmatprep.subr.mxu0 0.0
    %1284 = vmatpush2.msra.mxu0 0.0
    %1285 = vmatprep.subr.mxu0 0.0
    %1286 = vmatpush2.msra.mxu0 0.0
    %1287 = vmatprep.subr.mxu0 0.0
    %1288 = vmatpush2.msra.mxu0 0.0
    %1289 = vmatprep.subr.mxu0 0.0
    %1290 = vmatpush2.msra.mxu0 0.0
    %1291 = vmatprep.subr.mxu0 0.0
    %1292 = vmatpush2.msra.mxu0 0.0
    %1293 = vmatprep.subr.mxu0 0.0
    %1294 = vmatpush2.msra.mxu0 0.0
    %1295 = vmatprep.subr.mxu0 0.0
    %1296 = vmatpush2.msra.mxu0 0.0
    %1297 = vmatprep.subr.mxu0 0.0
    %1298 = vmatpush2.msra.mxu0 0.0
    %1299 = vmatprep.subr.mxu0 0.0
    %1300 = vmatpush2.msra.mxu0 0.0
    %1301 = vmatprep.subr.mxu0 0.0
    %1302 = vmatpush2.msra.mxu0 0.0
    %1303 = vmatprep.subr.mxu0 0.0
    %1304 = vmatpush2.msra.mxu0 0.0
    %1305 = vmatprep.subr.mxu0 0.0
    %1306 = vmatpush2.msra.mxu0 0.0
    %1307 = vmatprep.subr.mxu0 0.0
    %1308 = vmatpush2.msra.mxu0 0.0
    %1309 = vmatprep.mubr.f32.mxu0 0.0
    %1310 = vmatmul.mubr.f32.gmra.mxu0 %v1243
    %v1311 = vpop.f32.mrf.mxu0
    %v1312 = vadd.f32 0.0, %v1311
    %v1313 = vpop.f32.mrf.mxu0
    %1314 = vdwg.mxu0
    %v1316 = vsel %vm161, %v1236, 0
    %v1319 = vsel %vm161, %v1312, 0
    %1321 = vmatprep.subr.mxu0 0.0
    %1322 = vmatpush1.msra.mxu0 0.0
    %1323 = vmatprep.subr.mxu0 0.0
    %1324 = vmatpush1.msra.mxu0 0.0
    %1325 = vmatprep.subr.mxu0 0.0
    %1326 = vmatpush1.msra.mxu0 0.0
    %1327 = vmatprep.subr.mxu0 0.0
    %1328 = vmatpush1.msra.mxu0 0.0
    %1329 = vmatprep.subr.mxu0 0.0
    %1330 = vmatpush1.msra.mxu0 0.0
    %1331 = vmatprep.subr.mxu0 0.0
    %1332 = vmatpush1.msra.mxu0 0.0
    %1333 = vmatprep.subr.mxu0 0.0
    %1334 = vmatpush1.msra.mxu0 0.0
    %1335 = vmatprep.subr.mxu0 0.0
    %1336 = vmatpush1.msra.mxu0 0.0
    %1337 = vmatprep.subr.mxu0 0.0
    %1338 = vmatpush1.msra.mxu0 0.0
    %1339 = vmatprep.subr.mxu0 0.0
    %1340 = vmatpush1.msra.mxu0 0.0
    %1341 = vmatprep.subr.mxu0 0.0
    %1342 = vmatpush1.msra.mxu0 0.0
    %1343 = vmatprep.subr.mxu0 0.0
    %1344 = vmatpush1.msra.mxu0 0.0
    %1345 = vmatprep.subr.mxu0 0.0
    %1346 = vmatpush1.msra.mxu0 0.0
    %1347 = vmatprep.subr.mxu0 0.0
    %1348 = vmatpush1.msra.mxu0 0.0
    %1349 = vmatprep.subr.mxu0 0.0
    %1350 = vmatpush1.msra.mxu0 0.0
    %1351 = vmatprep.subr.mxu0 0.0
    %1352 = vmatpush1.msra.mxu0 %v156
    %1353 = vmatprep.subr.mxu0 0.0
    %1354 = vmatpush2.msra.mxu0 0.0
    %1355 = vmatprep.subr.mxu0 0.0
    %1356 = vmatpush2.msra.mxu0 0.0
    %1357 = vmatprep.subr.mxu0 0.0
    %1358 = vmatpush2.msra.mxu0 0.0
    %1359 = vmatprep.subr.mxu0 0.0
    %1360 = vmatpush2.msra.mxu0 0.0
    %1361 = vmatprep.subr.mxu0 0.0
    %1362 = vmatpush2.msra.mxu0 0.0
    %1363 = vmatprep.subr.mxu0 0.0
    %1364 = vmatpush2.msra.mxu0 0.0
    %1365 = vmatprep.subr.mxu0 0.0
    %1366 = vmatpush2.msra.mxu0 0.0
    %1367 = vmatprep.subr.mxu0 0.0
    %1368 = vmatpush2.msra.mxu0 0.0
    %1369 = vmatprep.subr.mxu0 0.0
    %1370 = vmatpush2.msra.mxu0 0.0
    %1371 = vmatprep.subr.mxu0 0.0
    %1372 = vmatpush2.msra.mxu0 0.0
    %1373 = vmatprep.subr.mxu0 0.0
    %1374 = vmatpush2.msra.mxu0 0.0
    %1375 = vmatprep.subr.mxu0 0.0
    %1376 = vmatpush2.msra.mxu0 0.0
    %1377 = vmatprep.subr.mxu0 0.0
    %1378 = vmatpush2.msra.mxu0 0.0
    %1379 = vmatprep.subr.mxu0 0.0
    %1380 = vmatpush2.msra.mxu0 0.0
    %1381 = vmatprep.subr.mxu0 0.0
    %1382 = vmatpush2.msra.mxu0 0.0
    %1383 = vmatprep.subr.mxu0 0.0
    %1384 = vmatpush2.msra.mxu0 0.0
    %1385 = vmatprep.mubr.f32.mxu0 0.0
    %1386 = vmatmul.mubr.f32.gmra.mxu0 %v1316
    %v1387 = vpop.f32.mrf.mxu0
    %v1388 = vadd.f32 0.0, %v1387
    %v1389 = vpop.f32.mrf.mxu0
    %1390 = vmatprep.mubr.f32.mxu0 0.0
    %1391 = vmatmul.mubr.f32.gmra.mxu0 %v1319
    %v1392 = vpop.f32.mrf.mxu0
    %v1393 = vadd.f32 0.0, %v1392
    %v1394 = vpop.f32.mrf.mxu0
    %1395 = vdwg.mxu0
    %v1396 = vadd.f32 %v975, %v1388
    %v1397 = vadd.f32 %v980, %v1393
    %1398 = vrot.lane.b32.xlu0 %v146, 104
    %v1399 = vpop.permute.xlu0 %1398
    %1400 = vrot.lane.b32.xlu0 %v146, 72
    %v1401 = vpop.permute.xlu0 %1400
    %v1402 = vsel %vm161, %v1399, 0
    %v1404 = vsel %vm161, %v1401, 0
    %1406 = vmatprep.subr.mxu0 0.0
    %1407 = vmatpush1.xpose.msra.mxu0 0.0
    %1408 = vmatprep.subr.mxu0 0.0
    %1409 = vmatpush1.xpose.msra.mxu0 0.0
    %1410 = vmatprep.subr.mxu0 0.0
    %1411 = vmatpush1.xpose.msra.mxu0 0.0
    %1412 = vmatprep.subr.mxu0 0.0
    %1413 = vmatpush1.xpose.msra.mxu0 0.0
    %1414 = vmatprep.subr.mxu0 0.0
    %1415 = vmatpush1.xpose.msra.mxu0 0.0
    %1416 = vmatprep.subr.mxu0 0.0
    %1417 = vmatpush1.xpose.msra.mxu0 0.0
    %1418 = vmatprep.subr.mxu0 0.0
    %1419 = vmatpush1.xpose.msra.mxu0 0.0
    %1420 = vmatprep.subr.mxu0 0.0
    %1421 = vmatpush1.xpose.msra.mxu0 0.0
    %1422 = vmatprep.subr.mxu0 0.0
    %1423 = vmatpush1.xpose.msra.mxu0 0.0
    %1424 = vmatprep.subr.mxu0 0.0
    %1425 = vmatpush1.xpose.msra.mxu0 0.0
    %1426 = vmatprep.subr.mxu0 0.0
    %1427 = vmatpush1.xpose.msra.mxu0 0.0
    %1428 = vmatprep.subr.mxu0 0.0
    %1429 = vmatpush1.xpose.msra.mxu0 0.0
    %1430 = vmatprep.subr.mxu0 0.0
    %1431 = vmatpush1.xpose.msra.mxu0 0.0
    %1432 = vmatprep.subr.mxu0 0.0
    %1433 = vmatpush1.xpose.msra.mxu0 0.0
    %1434 = vmatprep.subr.mxu0 0.0
    %1435 = vmatpush1.xpose.msra.mxu0 0.0
    %1436 = vmatprep.subr.mxu0 0.0
    %1437 = vmatpush1.xpose.msra.mxu0 %v1404
    %1438 = vmatprep.subr.mxu0 0.0
    %1439 = vmatpush2.xpose.msra.mxu0 0.0
    %1440 = vmatprep.subr.mxu0 0.0
    %1441 = vmatpush2.xpose.msra.mxu0 0.0
    %1442 = vmatprep.subr.mxu0 0.0
    %1443 = vmatpush2.xpose.msra.mxu0 0.0
    %1444 = vmatprep.subr.mxu0 0.0
    %1445 = vmatpush2.xpose.msra.mxu0 0.0
    %1446 = vmatprep.subr.mxu0 0.0
    %1447 = vmatpush2.xpose.msra.mxu0 0.0
    %1448 = vmatprep.subr.mxu0 0.0
    %1449 = vmatpush2.xpose.msra.mxu0 0.0
    %1450 = vmatprep.subr.mxu0 0.0
    %1451 = vmatpush2.xpose.msra.mxu0 0.0
    %1452 = vmatprep.subr.mxu0 0.0
    %1453 = vmatpush2.xpose.msra.mxu0 0.0
    %1454 = vmatprep.subr.mxu0 0.0
    %1455 = vmatpush2.xpose.msra.mxu0 0.0
    %1456 = vmatprep.subr.mxu0 0.0
    %1457 = vmatpush2.xpose.msra.mxu0 0.0
    %1458 = vmatprep.subr.mxu0 0.0
    %1459 = vmatpush2.xpose.msra.mxu0 0.0
    %1460 = vmatprep.subr.mxu0 0.0
    %1461 = vmatpush2.xpose.msra.mxu0 0.0
    %1462 = vmatprep.subr.mxu0 0.0
    %1463 = vmatpush2.xpose.msra.mxu0 0.0
    %1464 = vmatprep.subr.mxu0 0.0
    %1465 = vmatpush2.xpose.msra.mxu0 0.0
    %1466 = vmatprep.subr.mxu0 0.0
    %1467 = vmatpush2.xpose.msra.mxu0 0.0
    %1468 = vmatprep.subr.mxu0 0.0
    %1469 = vmatpush2.xpose.msra.mxu0 0.0
    %1470 = vmatprep.mubr.f32.mxu0 0.0
    %1471 = vmatmul.mubr.f32.gmra.mxu0 %v1402
    %v1472 = vpop.f32.mrf.mxu0
    %v1473 = vadd.f32 0.0, %v1472
    %v1474 = vpop.f32.mrf.mxu0
    %1475 = vdwg.mxu0
    %1476 = vrot.lane.b32.xlu0 %v151, 104
    %v1477 = vpop.permute.xlu0 %1476
    %1478 = vrot.lane.b32.xlu0 %v151, 72
    %v1479 = vpop.permute.xlu0 %1478
    %v1480 = vsel %vm161, %v1477, 0
    %v1482 = vsel %vm161, %v1479, 0
    %1484 = vmatprep.subr.mxu0 0.0
    %1485 = vmatpush1.xpose.msra.mxu0 0.0
    %1486 = vmatprep.subr.mxu0 0.0
    %1487 = vmatpush1.xpose.msra.mxu0 0.0
    %1488 = vmatprep.subr.mxu0 0.0
    %1489 = vmatpush1.xpose.msra.mxu0 0.0
    %1490 = vmatprep.subr.mxu0 0.0
    %1491 = vmatpush1.xpose.msra.mxu0 0.0
    %1492 = vmatprep.subr.mxu0 0.0
    %1493 = vmatpush1.xpose.msra.mxu0 0.0
    %1494 = vmatprep.subr.mxu0 0.0
    %1495 = vmatpush1.xpose.msra.mxu0 0.0
    %1496 = vmatprep.subr.mxu0 0.0
    %1497 = vmatpush1.xpose.msra.mxu0 0.0
    %1498 = vmatprep.subr.mxu0 0.0
    %1499 = vmatpush1.xpose.msra.mxu0 0.0
    %1500 = vmatprep.subr.mxu0 0.0
    %1501 = vmatpush1.xpose.msra.mxu0 0.0
    %1502 = vmatprep.subr.mxu0 0.0
    %1503 = vmatpush1.xpose.msra.mxu0 0.0
    %1504 = vmatprep.subr.mxu0 0.0
    %1505 = vmatpush1.xpose.msra.mxu0 0.0
    %1506 = vmatprep.subr.mxu0 0.0
    %1507 = vmatpush1.xpose.msra.mxu0 0.0
    %1508 = vmatprep.subr.mxu0 0.0
    %1509 = vmatpush1.xpose.msra.mxu0 0.0
    %1510 = vmatprep.subr.mxu0 0.0
    %1511 = vmatpush1.xpose.msra.mxu0 0.0
    %1512 = vmatprep.subr.mxu0 0.0
    %1513 = vmatpush1.xpose.msra.mxu0 0.0
    %1514 = vmatprep.subr.mxu0 0.0
    %1515 = vmatpush1.xpose.msra.mxu0 %v1482
    %1516 = vmatprep.subr.mxu0 0.0
    %1517 = vmatpush2.xpose.msra.mxu0 0.0
    %1518 = vmatprep.subr.mxu0 0.0
    %1519 = vmatpush2.xpose.msra.mxu0 0.0
    %1520 = vmatprep.subr.mxu0 0.0
    %1521 = vmatpush2.xpose.msra.mxu0 0.0
    %1522 = vmatprep.subr.mxu0 0.0
    %1523 = vmatpush2.xpose.msra.mxu0 0.0
    %1524 = vmatprep.subr.mxu0 0.0
    %1525 = vmatpush2.xpose.msra.mxu0 0.0
    %1526 = vmatprep.subr.mxu0 0.0
    %1527 = vmatpush2.xpose.msra.mxu0 0.0
    %1528 = vmatprep.subr.mxu0 0.0
    %1529 = vmatpush2.xpose.msra.mxu0 0.0
    %1530 = vmatprep.subr.mxu0 0.0
    %1531 = vmatpush2.xpose.msra.mxu0 0.0
    %1532 = vmatprep.subr.mxu0 0.0
    %1533 = vmatpush2.xpose.msra.mxu0 0.0
    %1534 = vmatprep.subr.mxu0 0.0
    %1535 = vmatpush2.xpose.msra.mxu0 0.0
    %1536 = vmatprep.subr.mxu0 0.0
    %1537 = vmatpush2.xpose.msra.mxu0 0.0
    %1538 = vmatprep.subr.mxu0 0.0
    %1539 = vmatpush2.xpose.msra.mxu0 0.0
    %1540 = vmatprep.subr.mxu0 0.0
    %1541 = vmatpush2.xpose.msra.mxu0 0.0
    %1542 = vmatprep.subr.mxu0 0.0
    %1543 = vmatpush2.xpose.msra.mxu0 0.0
    %1544 = vmatprep.subr.mxu0 0.0
    %1545 = vmatpush2.xpose.msra.mxu0 0.0
    %1546 = vmatprep.subr.mxu0 0.0
    %1547 = vmatpush2.xpose.msra.mxu0 0.0
    %1548 = vmatprep.mubr.f32.mxu0 0.0
    %1549 = vmatmul.mubr.f32.gmra.mxu0 %v1480
    %v1550 = vpop.f32.mrf.mxu0
    %v1551 = vadd.f32 0.0, %v1550
    %v1552 = vpop.f32.mrf.mxu0
    %1553 = vdwg.mxu0
    %v1554 = vmul.f32 %v1473, 0.35355338
    %v1555 = vmul.f32 %v1551, 0.35355338
    %v1556 = vsel %vm161, %v1554, -inf
    %1557 = vmax.xlane.f32.xlu0 %v1556
    %v1558 = vpop.xlane.xlu0 %1557
    %v1559 = vsel %vm161, %v1555, -inf
    %1560 = vmax.xlane.f32.xlu0 %v1559
    %v1561 = vpop.xlane.xlu0 %1560
    %v1562 = vsub.f32 %v1554, %v1558
    %v1563 = vsub.f32 %v1555, %v1561
    %v1564 = vmul.f32 %v1562, 1.442695
    %v1565 = vpow.pop %v1564
    %v1566 = vmul.f32 %v1563, 1.442695
    %v1567 = vpow.pop %v1566
    %v1568 = vsel %vm161, %v1565, 0.0
    %1569 = vadd.xlane.f32.xlu0 %v1568
    %v1570 = vpop.xlane.xlu0 %1569
    %v1571 = vsel %vm161, %v1567, 0.0
    %1572 = vadd.xlane.f32.xlu0 %v1571
    %v1573 = vpop.xlane.xlu0 %1572
    %v1574 = vrcp.pop %v1570
    %v1575 = vrcp.pop %v1573
    %v1576 = vmul.f32 %v1565, %v1574
    %v1577 = vmul.f32 %v1567, %v1575
    %1578 = vrot.lane.b32.xlu0 %v146, 40
    %v1579 = vpop.permute.xlu0 %1578
    %v1582 = vsel %vm161, %v1576, 0
    %1584 = vmatprep.subr.mxu0 0.0
    %1585 = vmatpush1.msra.mxu0 0.0
    %1586 = vmatprep.subr.mxu0 0.0
    %1587 = vmatpush1.msra.mxu0 0.0
    %1588 = vmatprep.subr.mxu0 0.0
    %1589 = vmatpush1.msra.mxu0 0.0
    %1590 = vmatprep.subr.mxu0 0.0
    %1591 = vmatpush1.msra.mxu0 0.0
    %1592 = vmatprep.subr.mxu0 0.0
    %1593 = vmatpush1.msra.mxu0 0.0
    %1594 = vmatprep.subr.mxu0 0.0
    %1595 = vmatpush1.msra.mxu0 0.0
    %1596 = vmatprep.subr.mxu0 0.0
    %1597 = vmatpush1.msra.mxu0 0.0
    %1598 = vmatprep.subr.mxu0 0.0
    %1599 = vmatpush1.msra.mxu0 0.0
    %1600 = vmatprep.subr.mxu0 0.0
    %1601 = vmatpush1.msra.mxu0 0.0
    %1602 = vmatprep.subr.mxu0 0.0
    %1603 = vmatpush1.msra.mxu0 0.0
    %1604 = vmatprep.subr.mxu0 0.0
    %1605 = vmatpush1.msra.mxu0 0.0
    %1606 = vmatprep.subr.mxu0 0.0
    %1607 = vmatpush1.msra.mxu0 0.0
    %1608 = vmatprep.subr.mxu0 0.0
    %1609 = vmatpush1.msra.mxu0 0.0
    %1610 = vmatprep.subr.mxu0 0.0
    %1611 = vmatpush1.msra.mxu0 0.0
    %1612 = vmatprep.subr.mxu0 0.0
    %1613 = vmatpush1.msra.mxu0 0.0
    %1614 = vmatprep.subr.mxu0 0.0
    %1615 = vmatpush1.msra.mxu0 %v1579
    %1616 = vmatprep.subr.mxu0 0.0
    %1617 = vmatpush2.msra.mxu0 0.0
    %1618 = vmatprep.subr.mxu0 0.0
    %1619 = vmatpush2.msra.mxu0 0.0
    %1620 = vmatprep.subr.mxu0 0.0
    %1621 = vmatpush2.msra.mxu0 0.0
    %1622 = vmatprep.subr.mxu0 0.0
    %1623 = vmatpush2.msra.mxu0 0.0
    %1624 = vmatprep.subr.mxu0 0.0
    %1625 = vmatpush2.msra.mxu0 0.0
    %1626 = vmatprep.subr.mxu0 0.0
    %1627 = vmatpush2.msra.mxu0 0.0
    %1628 = vmatprep.subr.mxu0 0.0
    %1629 = vmatpush2.msra.mxu0 0.0
    %1630 = vmatprep.subr.mxu0 0.0
    %1631 = vmatpush2.msra.mxu0 0.0
    %1632 = vmatprep.subr.mxu0 0.0
    %1633 = vmatpush2.msra.mxu0 0.0
    %1634 = vmatprep.subr.mxu0 0.0
    %1635 = vmatpush2.msra.mxu0 0.0
    %1636 = vmatprep.subr.mxu0 0.0
    %1637 = vmatpush2.msra.mxu0 0.0
    %1638 = vmatprep.subr.mxu0 0.0
    %1639 = vmatpush2.msra.mxu0 0.0
    %1640 = vmatprep.subr.mxu0 0.0
    %1641 = vmatpush2.msra.mxu0 0.0
    %1642 = vmatprep.subr.mxu0 0.0
    %1643 = vmatpush2.msra.mxu0 0.0
    %1644 = vmatprep.subr.mxu0 0.0
    %1645 = vmatpush2.msra.mxu0 0.0
    %1646 = vmatprep.subr.mxu0 0.0
    %1647 = vmatpush2.msra.mxu0 0.0
    %1648 = vmatprep.mubr.f32.mxu0 0.0
    %1649 = vmatmul.mubr.f32.gmra.mxu0 %v1582
    %v1650 = vpop.f32.mrf.mxu0
    %v1651 = vadd.f32 0.0, %v1650
    %v1652 = vpop.f32.mrf.mxu0
    %1653 = vdwg.mxu0
    %1654 = vrot.lane.b32.xlu0 %v151, 40
    %v1655 = vpop.permute.xlu0 %1654
    %v1658 = vsel %vm161, %v1577, 0
    %1660 = vmatprep.subr.mxu0 0.0
    %1661 = vmatpush1.msra.mxu0 0.0
    %1662 = vmatprep.subr.mxu0 0.0
    %1663 = vmatpush1.msra.mxu0 0.0
    %1664 = vmatprep.subr.mxu0 0.0
    %1665 = vmatpush1.msra.mxu0 0.0
    %1666 = vmatprep.subr.mxu0 0.0
    %1667 = vmatpush1.msra.mxu0 0.0
    %1668 = vmatprep.subr.mxu0 0.0
    %1669 = vmatpush1.msra.mxu0 0.0
    %1670 = vmatprep.subr.mxu0 0.0
    %1671 = vmatpush1.msra.mxu0 0.0
    %1672 = vmatprep.subr.mxu0 0.0
    %1673 = vmatpush1.msra.mxu0 0.0
    %1674 = vmatprep.subr.mxu0 0.0
    %1675 = vmatpush1.msra.mxu0 0.0
    %1676 = vmatprep.subr.mxu0 0.0
    %1677 = vmatpush1.msra.mxu0 0.0
    %1678 = vmatprep.subr.mxu0 0.0
    %1679 = vmatpush1.msra.mxu0 0.0
    %1680 = vmatprep.subr.mxu0 0.0
    %1681 = vmatpush1.msra.mxu0 0.0
    %1682 = vmatprep.subr.mxu0 0.0
    %1683 = vmatpush1.msra.mxu0 0.0
    %1684 = vmatprep.subr.mxu0 0.0
    %1685 = vmatpush1.msra.mxu0 0.0
    %1686 = vmatprep.subr.mxu0 0.0
    %1687 = vmatpush1.msra.mxu0 0.0
    %1688 = vmatprep.subr.mxu0 0.0
    %1689 = vmatpush1.msra.mxu0 0.0
    %1690 = vmatprep.subr.mxu0 0.0
    %1691 = vmatpush1.msra.mxu0 %v1655
    %1692 = vmatprep.subr.mxu0 0.0
    %1693 = vmatpush2.msra.mxu0 0.0
    %1694 = vmatprep.subr.mxu0 0.0
    %1695 = vmatpush2.msra.mxu0 0.0
    %1696 = vmatprep.subr.mxu0 0.0
    %1697 = vmatpush2.msra.mxu0 0.0
    %1698 = vmatprep.subr.mxu0 0.0
    %1699 = vmatpush2.msra.mxu0 0.0
    %1700 = vmatprep.subr.mxu0 0.0
    %1701 = vmatpush2.msra.mxu0 0.0
    %1702 = vmatprep.subr.mxu0 0.0
    %1703 = vmatpush2.msra.mxu0 0.0
    %1704 = vmatprep.subr.mxu0 0.0
    %1705 = vmatpush2.msra.mxu0 0.0
    %1706 = vmatprep.subr.mxu0 0.0
    %1707 = vmatpush2.msra.mxu0 0.0
    %1708 = vmatprep.subr.mxu0 0.0
    %1709 = vmatpush2.msra.mxu0 0.0
    %1710 = vmatprep.subr.mxu0 0.0
    %1711 = vmatpush2.msra.mxu0 0.0
    %1712 = vmatprep.subr.mxu0 0.0
    %1713 = vmatpush2.msra.mxu0 0.0
    %1714 = vmatprep.subr.mxu0 0.0
    %1715 = vmatpush2.msra.mxu0 0.0
    %1716 = vmatprep.subr.mxu0 0.0
    %1717 = vmatpush2.msra.mxu0 0.0
    %1718 = vmatprep.subr.mxu0 0.0
    %1719 = vmatpush2.msra.mxu0 0.0
    %1720 = vmatprep.subr.mxu0 0.0
    %1721 = vmatpush2.msra.mxu0 0.0
    %1722 = vmatprep.subr.mxu0 0.0
    %1723 = vmatpush2.msra.mxu0 0.0
    %1724 = vmatprep.mubr.f32.mxu0 0.0
    %1725 = vmatmul.mubr.f32.gmra.mxu0 %v1658
    %v1726 = vpop.f32.mrf.mxu0
    %v1727 = vadd.f32 0.0, %v1726
    %v1728 = vpop.f32.mrf.mxu0
    %1729 = vdwg.mxu0
    %v1731 = vsel %vm161, %v1651, 0
    %v1734 = vsel %vm161, %v1727, 0
    %1736 = vmatprep.subr.mxu0 0.0
    %1737 = vmatpush1.msra.mxu0 0.0
    %1738 = vmatprep.subr.mxu0 0.0
    %1739 = vmatpush1.msra.mxu0 0.0
    %1740 = vmatprep.subr.mxu0 0.0
    %1741 = vmatpush1.msra.mxu0 0.0
    %1742 = vmatprep.subr.mxu0 0.0
    %1743 = vmatpush1.msra.mxu0 0.0
    %1744 = vmatprep.subr.mxu0 0.0
    %1745 = vmatpush1.msra.mxu0 0.0
    %1746 = vmatprep.subr.mxu0 0.0
    %1747 = vmatpush1.msra.mxu0 0.0
    %1748 = vmatprep.subr.mxu0 0.0
    %1749 = vmatpush1.msra.mxu0 0.0
    %1750 = vmatprep.subr.mxu0 0.0
    %1751 = vmatpush1.msra.mxu0 0.0
    %1752 = vmatprep.subr.mxu0 0.0
    %1753 = vmatpush1.msra.mxu0 0.0
    %1754 = vmatprep.subr.mxu0 0.0
    %1755 = vmatpush1.msra.mxu0 0.0
    %1756 = vmatprep.subr.mxu0 0.0
    %1757 = vmatpush1.msra.mxu0 0.0
    %1758 = vmatprep.subr.mxu0 0.0
    %1759 = vmatpush1.msra.mxu0 0.0
    %1760 = vmatprep.subr.mxu0 0.0
    %1761 = vmatpush1.msra.mxu0 0.0
    %1762 = vmatprep.subr.mxu0 0.0
    %1763 = vmatpush1.msra.mxu0 0.0
    %1764 = vmatprep.subr.mxu0 0.0
    %1765 = vmatpush1.msra.mxu0 0.0
    %1766 = vmatprep.subr.mxu0 0.0
    %1767 = vmatpush1.msra.mxu0 %v157
    %1768 = vmatprep.subr.mxu0 0.0
    %1769 = vmatpush2.msra.mxu0 0.0
    %1770 = vmatprep.subr.mxu0 0.0
    %1771 = vmatpush2.msra.mxu0 0.0
    %1772 = vmatprep.subr.mxu0 0.0
    %1773 = vmatpush2.msra.mxu0 0.0
    %1774 = vmatprep.subr.mxu0 0.0
    %1775 = vmatpush2.msra.mxu0 0.0
    %1776 = vmatprep.subr.mxu0 0.0
    %1777 = vmatpush2.msra.mxu0 0.0
    %1778 = vmatprep.subr.mxu0 0.0
    %1779 = vmatpush2.msra.mxu0 0.0
    %1780 = vmatprep.subr.mxu0 0.0
    %1781 = vmatpush2.msra.mxu0 0.0
    %1782 = vmatprep.subr.mxu0 0.0
    %1783 = vmatpush2.msra.mxu0 0.0
    %1784 = vmatprep.subr.mxu0 0.0
    %1785 = vmatpush2.msra.mxu0 0.0
    %1786 = vmatprep.subr.mxu0 0.0
    %1787 = vmatpush2.msra.mxu0 0.0
    %1788 = vmatprep.subr.mxu0 0.0
    %1789 = vmatpush2.msra.mxu0 0.0
    %1790 = vmatprep.subr.mxu0 0.0
    %1791 = vmatpush2.msra.mxu0 0.0
    %1792 = vmatprep.subr.mxu0 0.0
    %1793 = vmatpush2.msra.mxu0 0.0
    %1794 = vmatprep.subr.mxu0 0.0
    %1795 = vmatpush2.msra.mxu0 0.0
    %1796 = vmatprep.subr.mxu0 0.0
    %1797 = vmatpush2.msra.mxu0 0.0
    %1798 = vmatprep.subr.mxu0 0.0
    %1799 = vmatpush2.msra.mxu0 0.0
    %1800 = vmatprep.mubr.f32.mxu0 0.0
    %1801 = vmatmul.mubr.f32.gmra.mxu0 %v1731
    %v1802 = vpop.f32.mrf.mxu0
    %v1803 = vadd.f32 0.0, %v1802
    %v1804 = vpop.f32.mrf.mxu0
    %1805 = vmatprep.mubr.f32.mxu0 0.0
    %1806 = vmatmul.mubr.f32.gmra.mxu0 %v1734
    %v1807 = vpop.f32.mrf.mxu0
    %v1808 = vadd.f32 0.0, %v1807
    %v1809 = vpop.f32.mrf.mxu0
    %1810 = vdwg.mxu0
    %v1811 = vadd.f32 %v1396, %v1803
    %v1812 = vadd.f32 %v1397, %v1808
    %v1813 = vld [vmem:[%s4] sm:$0x1]
    %v1815 = vlaneseq
    %v1816 = vshrl.u32 %v1815, 7
    %v1817 = vsub.s32 0, %v1816
    %v1818 = vrot.slane %v1813, %v1817
    %v1820 = vadd.f32 %v1811, %v1818
    %v1821 = vadd.f32 %v1812, %v1818
    %v1822 = vadd.f32 %v1820, %v59
    %v1823 = vadd.f32 %v1821, %v60
    %v1824 = vld [vmem:[%s5] sm:$0x1]
    %v1825 = vld [vmem:[%s6] sm:$0x1]
    %v1826 = vsel %vm72, %v1822, 0.0
    %1827 = vadd.xlane.f32.xlu0 %v1826
    %v1828 = vpop.xlane.xlu0 %1827
    %v1829 = vsel %vm72, %v1823, 0.0
    %1830 = vadd.xlane.f32.xlu0 %v1829
    %v1831 = vpop.xlane.xlu0 %1830
    %v1832 = vrcp.pop 32.0
    %v1833 = vmul.f32 %v1828, %v1832
    %v1834 = vmul.f32 %v1831, %v1832
    %v1835 = vsub.f32 %v1822, %v1833
    %v1836 = vsub.f32 %v1823, %v1834
    %v1837 = vmul.f32 %v1835, %v1835
    %v1838 = vmul.f32 %v1836, %v1836
    %v1839 = vsel %vm72, %v1837, 0.0
    %1840 = vadd.xlane.f32.xlu0 %v1839
    %v1841 = vpop.xlane.xlu0 %1840
    %v1842 = vsel %vm72, %v1838, 0.0
    %1843 = vadd.xlane.f32.xlu0 %v1842
    %v1844 = vpop.xlane.xlu0 %1843
    %v1845 = vmul.f32 %v1841, %v1832
    %v1846 = vmul.f32 %v1844, %v1832
    %v1847 = vadd.f32 %v1845, 1e-05
    %v1848 = vadd.f32 %v1846, 1e-05
    %v1849 = vrsqrt.pop %v1847
    %v1850 = vrsqrt.pop %v1848
    %v1851 = vmul.f32 %v1835, %v1849
    %v1852 = vmul.f32 %v1836, %v1850
    %v1854 = vlaneseq
    %v1855 = vshrl.u32 %v1854, 7
    %v1856 = vsub.s32 0, %v1855
    %v1857 = vrot.slane %v1824, %v1856
    %v1859 = vmul.f32 %v1851, %v1857
    %v1860 = vmul.f32 %v1852, %v1857
    %v1862 = vlaneseq
    %v1863 = vshrl.u32 %v1862, 7
    %v1864 = vsub.s32 0, %v1863
    %v1865 = vrot.slane %v1825, %v1864
    %v1867 = vadd.f32 %v1859, %v1865
    %v1868 = vadd.f32 %v1860, %v1865
    %v1869 = vld [vmem:[%s7] sm:$0xff]
    %v1870 = vld [vmem:[%s7 + $0x8] sm:$0xff]
    %v1871 = vld [vmem:[%s7 + $0x10] sm:$0xff]
    %v1872 = vld [vmem:[%s7 + $0x18] sm:$0xff]
    %v1873 = vld [vmem:[%s8] sm:$0x1]
    %v1875 = vlaneseq
    %v1876 = vshrl.u32 %v1875, 7
    %v1877 = vsub.s32 0, %v1876
    %v1878 = vrot.slane %v1873, %v1877
    %v1881 = vsel %vm72, %v1867, 0
    %v1884 = vsel %vm72, %v1868, 0
    %1886 = vmatprep.subr.mxu0 0.0
    %1887 = vmatpush1.msra.mxu0 0.0
    %1888 = vmatprep.subr.mxu0 0.0
    %1889 = vmatpush1.msra.mxu0 0.0
    %1890 = vmatprep.subr.mxu0 0.0
    %1891 = vmatpush1.msra.mxu0 0.0
    %1892 = vmatprep.subr.mxu0 0.0
    %1893 = vmatpush1.msra.mxu0 0.0
    %1894 = vmatprep.subr.mxu0 0.0
    %1895 = vmatpush1.msra.mxu0 0.0
    %1896 = vmatprep.subr.mxu0 0.0
    %1897 = vmatpush1.msra.mxu0 0.0
    %1898 = vmatprep.subr.mxu0 0.0
    %1899 = vmatpush1.msra.mxu0 0.0
    %1900 = vmatprep.subr.mxu0 0.0
    %1901 = vmatpush1.msra.mxu0 0.0
    %1902 = vmatprep.subr.mxu0 0.0
    %1903 = vmatpush1.msra.mxu0 0.0
    %1904 = vmatprep.subr.mxu0 0.0
    %1905 = vmatpush1.msra.mxu0 0.0
    %1906 = vmatprep.subr.mxu0 0.0
    %1907 = vmatpush1.msra.mxu0 0.0
    %1908 = vmatprep.subr.mxu0 0.0
    %1909 = vmatpush1.msra.mxu0 0.0
    %1910 = vmatprep.subr.mxu0 0.0
    %1911 = vmatpush1.msra.mxu0 %v1872
    %1912 = vmatprep.subr.mxu0 0.0
    %1913 = vmatpush1.msra.mxu0 %v1871
    %1914 = vmatprep.subr.mxu0 0.0
    %1915 = vmatpush1.msra.mxu0 %v1870
    %1916 = vmatprep.subr.mxu0 0.0
    %1917 = vmatpush1.msra.mxu0 %v1869
    %1918 = vmatprep.subr.mxu0 0.0
    %1919 = vmatpush2.msra.mxu0 0.0
    %1920 = vmatprep.subr.mxu0 0.0
    %1921 = vmatpush2.msra.mxu0 0.0
    %1922 = vmatprep.subr.mxu0 0.0
    %1923 = vmatpush2.msra.mxu0 0.0
    %1924 = vmatprep.subr.mxu0 0.0
    %1925 = vmatpush2.msra.mxu0 0.0
    %1926 = vmatprep.subr.mxu0 0.0
    %1927 = vmatpush2.msra.mxu0 0.0
    %1928 = vmatprep.subr.mxu0 0.0
    %1929 = vmatpush2.msra.mxu0 0.0
    %1930 = vmatprep.subr.mxu0 0.0
    %1931 = vmatpush2.msra.mxu0 0.0
    %1932 = vmatprep.subr.mxu0 0.0
    %1933 = vmatpush2.msra.mxu0 0.0
    %1934 = vmatprep.subr.mxu0 0.0
    %1935 = vmatpush2.msra.mxu0 0.0
    %1936 = vmatprep.subr.mxu0 0.0
    %1937 = vmatpush2.msra.mxu0 0.0
    %1938 = vmatprep.subr.mxu0 0.0
    %1939 = vmatpush2.msra.mxu0 0.0
    %1940 = vmatprep.subr.mxu0 0.0
    %1941 = vmatpush2.msra.mxu0 0.0
    %1942 = vmatprep.subr.mxu0 0.0
    %1943 = vmatpush2.msra.mxu0 0.0
    %1944 = vmatprep.subr.mxu0 0.0
    %1945 = vmatpush2.msra.mxu0 0.0
    %1946 = vmatprep.subr.mxu0 0.0
    %1947 = vmatpush2.msra.mxu0 0.0
    %1948 = vmatprep.subr.mxu0 0.0
    %1949 = vmatpush2.msra.mxu0 0.0
    %1950 = vmatprep.mubr.f32.mxu0 0.0
    %1951 = vmatmul.mubr.f32.gmra.mxu0 %v1881
    %v1952 = vpop.f32.mrf.mxu0
    %v1953 = vadd.f32 %v1878, %v1952
    %v1954 = vpop.f32.mrf.mxu0
    %1955 = vmatprep.mubr.f32.mxu0 0.0
    %1956 = vmatmul.mubr.f32.gmra.mxu0 %v1884
    %v1957 = vpop.f32.mrf.mxu0
    %v1958 = vadd.f32 %v1878, %v1957
    %v1959 = vpop.f32.mrf.mxu0
    %1960 = vdwg.mxu0
    %v1961 = vmax.f32 %v1953, 0.0
    %v1962 = vmax.f32 %v1958, 0.0
    %v1963 = vld [vmem:[%s9] sm:$0xff]
    %v1964 = vld [vmem:[%s9 + $0x8] sm:$0xff]
    %v1965 = vld [vmem:[%s9 + $0x10] sm:$0xff]
    %v1966 = vld [vmem:[%s9 + $0x18] sm:$0xff]
    %v1967 = vld [vmem:[%s9 + $0x20] sm:$0xff]
    %v1968 = vld [vmem:[%s9 + $0x28] sm:$0xff]
    %v1969 = vld [vmem:[%s9 + $0x30] sm:$0xff]
    %v1970 = vld [vmem:[%s9 + $0x38] sm:$0xff]
    %v1971 = vld [vmem:[%s10] sm:$0x1]
    %v1973 = vlaneseq
    %v1974 = vshrl.u32 %v1973, 7
    %v1975 = vsub.s32 0, %v1974
    %v1976 = vrot.slane %v1971, %v1975
    %vm1978 = vcmask 523264
    %v1980 = vsel %vm1978, %v1961, 0
    %v1983 = vsel %vm1978, %v1962, 0
    %1985 = vmatprep.subr.mxu0 0.0
    %1986 = vmatpush1.msra.mxu0 0.0
    %1987 = vmatprep.subr.mxu0 0.0
    %1988 = vmatpush1.msra.mxu0 0.0
    %1989 = vmatprep.subr.mxu0 0.0
    %1990 = vmatpush1.msra.mxu0 0.0
    %1991 = vmatprep.subr.mxu0 0.0
    %1992 = vmatpush1.msra.mxu0 0.0
    %1993 = vmatprep.subr.mxu0 0.0
    %1994 = vmatpush1.msra.mxu0 0.0
    %1995 = vmatprep.subr.mxu0 0.0
    %1996 = vmatpush1.msra.mxu0 0.0
    %1997 = vmatprep.subr.mxu0 0.0
    %1998 = vmatpush1.msra.mxu0 0.0
    %1999 = vmatprep.subr.mxu0 0.0
    %2000 = vmatpush1.msra.mxu0 0.0
    %2001 = vmatprep.subr.mxu0 0.0
    %2002 = vmatpush1.msra.mxu0 %v1970
    %2003 = vmatprep.subr.mxu0 0.0
    %2004 = vmatpush1.msra.mxu0 %v1969
    %2005 = vmatprep.subr.mxu0 0.0
    %2006 = vmatpush1.msra.mxu0 %v1968
    %2007 = vmatprep.subr.mxu0 0.0
    %2008 = vmatpush1.msra.mxu0 %v1967
    %2009 = vmatprep.subr.mxu0 0.0
    %2010 = vmatpush1.msra.mxu0 %v1966
    %2011 = vmatprep.subr.mxu0 0.0
    %2012 = vmatpush1.msra.mxu0 %v1965
    %2013 = vmatprep.subr.mxu0 0.0
    %2014 = vmatpush1.msra.mxu0 %v1964
    %2015 = vmatprep.subr.mxu0 0.0
    %2016 = vmatpush1.msra.mxu0 %v1963
    %2017 = vmatprep.subr.mxu0 0.0
    %2018 = vmatpush2.msra.mxu0 0.0
    %2019 = vmatprep.subr.mxu0 0.0
    %2020 = vmatpush2.msra.mxu0 0.0
    %2021 = vmatprep.subr.mxu0 0.0
    %2022 = vmatpush2.msra.mxu0 0.0
    %2023 = vmatprep.subr.mxu0 0.0
    %2024 = vmatpush2.msra.mxu0 0.0
    %2025 = vmatprep.subr.mxu0 0.0
    %2026 = vmatpush2.msra.mxu0 0.0
    %2027 = vmatprep.subr.mxu0 0.0
    %2028 = vmatpush2.msra.mxu0 0.0
    %2029 = vmatprep.subr.mxu0 0.0
    %2030 = vmatpush2.msra.mxu0 0.0
    %2031 = vmatprep.subr.mxu0 0.0
    %2032 = vmatpush2.msra.mxu0 0.0
    %2033 = vmatprep.subr.mxu0 0.0
    %2034 = vmatpush2.msra.mxu0 0.0
    %2035 = vmatprep.subr.mxu0 0.0
    %2036 = vmatpush2.msra.mxu0 0.0
    %2037 = vmatprep.subr.mxu0 0.0
    %2038 = vmatpush2.msra.mxu0 0.0
    %2039 = vmatprep.subr.mxu0 0.0
    %2040 = vmatpush2.msra.mxu0 0.0
    %2041 = vmatprep.subr.mxu0 0.0
    %2042 = vmatpush2.msra.mxu0 0.0
    %2043 = vmatprep.subr.mxu0 0.0
    %2044 = vmatpush2.msra.mxu0 0.0
    %2045 = vmatprep.subr.mxu0 0.0
    %2046 = vmatpush2.msra.mxu0 0.0
    %2047 = vmatprep.subr.mxu0 0.0
    %2048 = vmatpush2.msra.mxu0 0.0
    %2049 = vmatprep.mubr.f32.mxu0 0.0
    %2050 = vmatmul.mubr.f32.gmra.mxu0 %v1980
    %v2051 = vpop.f32.mrf.mxu0
    %v2052 = vadd.f32 %v1976, %v2051
    %v2053 = vpop.f32.mrf.mxu0
    %2054 = vmatprep.mubr.f32.mxu0 0.0
    %2055 = vmatmul.mubr.f32.gmra.mxu0 %v1983
    %v2056 = vpop.f32.mrf.mxu0
    %v2057 = vadd.f32 %v1976, %v2056
    %v2058 = vpop.f32.mrf.mxu0
    %2059 = vdwg.mxu0
    %v2060 = vadd.f32 %v2052, %v1867
    %v2061 = vadd.f32 %v2057, %v1868
    %v2062 = vld [vmem:[%s11] sm:$0x1]
    %v2063 = vld [vmem:[%s12] sm:$0x1]
    %v2064 = vsel %vm72, %v2060, 0.0
    %2065 = vadd.xlane.f32.xlu0 %v2064
    %v2066 = vpop.xlane.xlu0 %2065
    %v2067 = vsel %vm72, %v2061, 0.0
    %2068 = vadd.xlane.f32.xlu0 %v2067
    %v2069 = vpop.xlane.xlu0 %2068
    %v2070 = vmul.f32 %v2066, %v1832
    %v2071 = vmul.f32 %v2069, %v1832
    %v2072 = vsub.f32 %v2060, %v2070
    %v2073 = vsub.f32 %v2061, %v2071
    %v2074 = vmul.f32 %v2072, %v2072
    %v2075 = vmul.f32 %v2073, %v2073
    %v2076 = vsel %vm72, %v2074, 0.0
    %2077 = vadd.xlane.f32.xlu0 %v2076
    %v2078 = vpop.xlane.xlu0 %2077
    %v2079 = vsel %vm72, %v2075, 0.0
    %2080 = vadd.xlane.f32.xlu0 %v2079
    %v2081 = vpop.xlane.xlu0 %2080
    %v2082 = vmul.f32 %v2078, %v1832
    %v2083 = vmul.f32 %v2081, %v1832
    %v2084 = vadd.f32 %v2082, 1e-05
    %v2085 = vadd.f32 %v2083, 1e-05
    %v2086 = vrsqrt.pop %v2084
    %v2087 = vrsqrt.pop %v2085
    %v2088 = vmul.f32 %v2072, %v2086
    %v2089 = vmul.f32 %v2073, %v2087
    %v2091 = vlaneseq
    %v2092 = vshrl.u32 %v2091, 7
    %v2093 = vsub.s32 0, %v2092
    %v2094 = vrot.slane %v2062, %v2093
    %v2096 = vmul.f32 %v2088, %v2094
    %v2097 = vmul.f32 %v2089, %v2094
    %v2099 = vlaneseq
    %v2100 = vshrl.u32 %v2099, 7
    %v2101 = vsub.s32 0, %v2100
    %v2102 = vrot.slane %v2063, %v2101
    %v2104 = vadd.f32 %v2096, %v2102
    %v2105 = vadd.f32 %v2097, %v2102
    %2106 = vst.msk [vmem:[#allocation5] sm:$0xff] %vm72, %v2104
    %2107 = vst.msk [vmem:[#allocation5 + $0x8] sm:$0xff] %vm72, %v2105
    // Predicated region
    $region58: #{tpu_custom_call.1} parent=1 // pred_check
      _
    $region59: #{tpu_custom_call.1} parent=1 // pred_check_branch
      %2109 = sbr.rel (0) target = $region61
    $region60: #{tpu_custom_call.1} parent=1 // pred_region
      %s2111 = ssub.s32 256, 256
      %2112 = vsyncadd [#allocation4], %s2111
      %s2113 = sshll.u32 [#allocation5], 4
      %s2114 = int_to_ptr.vmem [resolvable:$true] %s2113
      %2119 = dma.vmem_to_hbm [thread:$0]  %s2114, 256, %s13, [#allocation4], 128, 128, 8
    $region61: #{tpu_custom_call.1} parent=1 // pred_fallthru
      _
    // Predicated region
    $region62: #{tpu_custom_call.1} parent=1 // pred_check
      _
    $region63: #{tpu_custom_call.1} parent=1 // pred_check_branch
      %2121 = sbr.rel (0) target = $region65
    $region64: #{tpu_custom_call.1} parent=1 // pred_region
      %2122 = dma.done [#allocation4], 256
    $region65: #{tpu_custom_call.1} parent=1 // pred_fallthru
      _
    %2123 = vsyncpa [#allocation3], 1
    %2124 = vsyncpa [#allocation4], 1

</llo_original>
